<compile_context>
chip_gen: v5e
topology: v5e:2x2
jax: 0.10.0
libtpu: 0.0.40
codegen_flags: <defaults>
</compile_context>

<pallas_src>
import jax
import jax.numpy as jnp
from jax.experimental import pallas as pl
from jax.experimental.pallas import tpu as pltpu

TB = 8  # batch rows per grid step = one full f32 sublane group

# Set to jax.lax.Precision.HIGHEST if bit-level closeness to fp32 PyTorch
# matters; DEFAULT keeps single-pass MXU matmuls (MXU is nowhere near binding
# at these shapes either way).
MATMUL_PRECISION = jax.lax.Precision.DEFAULT


def rhythm_lstm_kernel(
    x_ref,      # (T, TB, D_in)  time-major batch tile
    wih1_ref,   # (D_in, 4H)     weight_ih_l0.T
    whh1_ref,   # (H,    4H)     weight_hh_l0.T
    b1_ref,     # (1,    4H)     bias_ih_l0 + bias_hh_l0
    w2_ref,     # (2H,   4H)     [weight_ih_l1.T ; weight_hh_l1.T]
    b2_ref,     # (1,    4H)     bias_ih_l1 + bias_hh_l1
    wfc_ref,    # (H,    C)      fc.weight.T
    bfc_ref,    # (1,    C)      fc.bias
    out_ref,    # (TB,   C)
):
    T, tb, D = x_ref.shape
    H = whh1_ref.shape[0]

    def mm(a, b):
        return jnp.dot(a, b, preferred_element_type=jnp.float32,
                       precision=MATMUL_PRECISION)

    # ---- Hoisted layer-1 input projection: ONE (T*TB, D) @ (D, 4H) matmul ----
    # x_ref is time-major, so rows [t*TB : (t+1)*TB] of xproj belong to step t.
    x2d = x_ref[...].reshape(T * tb, D)
    xproj = mm(x2d, wih1_ref[...]) + b1_ref[...]          # (T*TB, 4H)

    def gates_to_hc(gates, c):
        # Two full-width (TB, 4H) activations, then static slices of the
        # already-activated vregs.  PyTorch gate order [i, f, g, o].
        sig = jax.nn.sigmoid(gates)
        th = jnp.tanh(gates)
        i = sig[:, 0 * H:1 * H]
        f = sig[:, 1 * H:2 * H]
        g = th[:, 2 * H:3 * H]
        o = sig[:, 3 * H:4 * H]
        c_new = f * c + i * g
        h_new = o * jnp.tanh(c_new)
        return h_new, c_new

    h1 = jnp.zeros((tb, H), jnp.float32)
    c1 = jnp.zeros((tb, H), jnp.float32)
    h2 = jnp.zeros((tb, H), jnp.float32)
    c2 = jnp.zeros((tb, H), jnp.float32)

    # T is small & static: keep the Python unroll so the serial chain stays
    # visible to the scheduler (a fori_loop boundary would hide cross-layer
    # overlap between layer-1 and layer-2 of the same step).
    for t in range(T):
        # Layer 1: input projection precomputed; only h1 @ W_hh1 on the chain.
        g1 = xproj[t * tb:(t + 1) * tb, :] + mm(h1, whh1_ref[...])
        h1, c1 = gates_to_hc(g1, c1)
        # Layer 2: fused input+recurrent matmul against pre-concatenated weights.
        g2 = mm(jnp.concatenate([h1, h2], axis=-1), w2_ref[...]) + b2_ref[...]
        h2, c2 = gates_to_hc(g2, c2)

    # out = fc(out[:, -1, :])  — top-layer hidden state at the last timestep.
    out_ref[...] = mm(h2, wfc_ref[...]) + bfc_ref[...]


def rhythm_lstm(x, params):
    """x: (B, T, D_in) float32, batch-first (as in the PyTorch module).

    Returns (B, num_classes) float32.
    """
    B, T, D = x.shape
    C = params["wfc"].shape[1]

    # Pad batch to a full sublane group; padded rows are computed then dropped.
    Bp = ((B + TB - 1) // TB) * TB
    if Bp != B:
        x = jnp.pad(x, ((0, Bp - B), (0, 0), (0, 0)))

    # Time-major layout (pure layout plumbing) so the hoisted layer-1
    # projection can be row-sliced contiguously per timestep inside the kernel.
    x_tm = jnp.transpose(x, (1, 0, 2))  # (T, Bp, D)

    def full_spec(arr):
        zeros = (0,) * arr.ndim
        return pl.BlockSpec(arr.shape, lambda i: zeros)

    weights = (params["wih1"], params["whh1"], params["b1"],
               params["w2"], params["b2"], params["wfc"], params["bfc"])

    out = pl.pallas_call(
        rhythm_lstm_kernel,
        out_shape=jax.ShapeDtypeStruct((Bp, C), jnp.float32),
        grid=(Bp // TB,),
        in_specs=[pl.BlockSpec((T, TB, D), lambda i: (0, i, 0))]
                 + [full_spec(w) for w in weights],
        out_specs=pl.BlockSpec((TB, C), lambda i: (i, 0)),
        compiler_params=pltpu.CompilerParams(
            dimension_semantics=("parallel",)),  # shards batch over v7x's 2 TCs
    )(x_tm, *weights)
    return out[:B]


def init_params(key, input_size, hidden_size, num_classes):
    """Deterministic init mimicking PyTorch's U(-1/sqrt(H), 1/sqrt(H)),
    returned in the pre-transposed / pre-fused layout the kernel expects."""
    H = hidden_size
    k = 1.0 / jnp.sqrt(jnp.float32(H))
    keys = jax.random.split(key, 10)

    def u(k_, shape):
        return jax.random.uniform(k_, shape, jnp.float32, -k, k)

    wih1 = u(keys[0], (4 * H, input_size))   # weight_ih_l0
    whh1 = u(keys[1], (4 * H, H))            # weight_hh_l0
    b1 = u(keys[2], (4 * H,)) + u(keys[3], (4 * H,))
    wih2 = u(keys[4], (4 * H, H))            # weight_ih_l1
    whh2 = u(keys[5], (4 * H, H))            # weight_hh_l1
    b2 = u(keys[6], (4 * H,)) + u(keys[7], (4 * H,))
    wfc = u(keys[8], (num_classes, H))       # fc.weight
    bfc = u(keys[9], (num_classes,))         # fc.bias

    return {
        "wih1": wih1.T,                                   # (D_in, 4H)
        "whh1": whh1.T,                                   # (H,    4H)
        "b1": b1.reshape(1, 4 * H),
        "w2": jnp.concatenate([wih2.T, whh2.T], axis=0),  # (2H,   4H)
        "b2": b2.reshape(1, 4 * H),
        "wfc": wfc.T,                                     # (H,    C)
        "bfc": bfc.reshape(1, num_classes),
    }


def rhythm_lstm_ref(x, params):
    """Pure-JAX reference with identical semantics (for a sanity check)."""
    B, T, _ = x.shape
    H = params["whh1"].shape[0]
    wih2_T, whh2_T = params["w2"][:H], params["w2"][H:]

    def cell(x_t, h, c, wih_T, whh_T, b):
        g = x_t @ wih_T + h @ whh_T + b
        i = jax.nn.sigmoid(g[:, :H])
        f = jax.nn.sigmoid(g[:, H:2 * H])
        gg = jnp.tanh(g[:, 2 * H:3 * H])
        o = jax.nn.sigmoid(g[:, 3 * H:])
        c = f * c + i * gg
        return o * jnp.tanh(c), c

    z = jnp.zeros((B, H), jnp.float32)
    h1, c1, h2, c2 = z, z, z, z
    for t in range(T):
        h1, c1 = cell(x[:, t, :], h1, c1,
                      params["wih1"], params["whh1"], params["b1"])
        h2, c2 = cell(h1, h2, c2, wih2_T, whh2_T, params["b2"])
    return h2 @ params["wfc"] + params["bfc"]


if __name__ == "__main__":
    # Small shapes consistent with the module's forward (real config is
    # input_size=128*128, hidden=256, classes=5, layers=2 — scaled down here).
    B, T, D_IN, H, C = 2, 8, 64, 32, 5

    key = jax.random.PRNGKey(0)
    k_x, k_p = jax.random.split(key)
    x = jax.random.normal(k_x, (B, T, D_IN), jnp.float32)
    params = init_params(k_p, D_IN, H, C)

    out = rhythm_lstm(x, params)
    jax.block_until_ready(out)
    assert out.shape == (B, C) and out.dtype == jnp.float32

    ref = rhythm_lstm_ref(x, params)
    assert jnp.allclose(out, ref, rtol=5e-2, atol=5e-2), float(
        jnp.max(jnp.abs(out - ref)))

    print("KERNEL_OK")
</pallas_src>

<mosaic_0001>
module attributes {stable_mosaic.version = 11 : i64} {
  func.func @rhythm_lstm_kernel(%arg0: i32, %arg1: memref<8x8x64xf32, #tpu.memory_space<vmem>>, %arg2: memref<64x128xf32, #tpu.memory_space<vmem>>, %arg3: memref<32x128xf32, #tpu.memory_space<vmem>>, %arg4: memref<1x128xf32, #tpu.memory_space<vmem>>, %arg5: memref<64x128xf32, #tpu.memory_space<vmem>>, %arg6: memref<1x128xf32, #tpu.memory_space<vmem>>, %arg7: memref<32x5xf32, #tpu.memory_space<vmem>>, %arg8: memref<1x5xf32, #tpu.memory_space<vmem>>, %arg9: memref<8x5xf32, #tpu.memory_space<vmem>>) attributes {dimension_semantics = [#tpu.dimension_semantics<parallel>], iteration_bounds = array<i64: 1>, scalar_prefetch = 0 : i64, scratch_operands = 0 : i64, tpu.core_type = #tpu.core_type<tc>, window_params = [{transform_indices = @transform_0, window_bounds = array<i64: 8, 8, 64>}, {pipeline_mode = #tpu.pipeline_mode<synchronous>, transform_indices = @transform_1, window_bounds = array<i64: 64, 128>}, {pipeline_mode = #tpu.pipeline_mode<synchronous>, transform_indices = @transform_2, window_bounds = array<i64: 32, 128>}, {pipeline_mode = #tpu.pipeline_mode<synchronous>, transform_indices = @transform_3, window_bounds = array<i64: 1, 128>}, {pipeline_mode = #tpu.pipeline_mode<synchronous>, transform_indices = @transform_4, window_bounds = array<i64: 64, 128>}, {pipeline_mode = #tpu.pipeline_mode<synchronous>, transform_indices = @transform_5, window_bounds = array<i64: 1, 128>}, {pipeline_mode = #tpu.pipeline_mode<synchronous>, transform_indices = @transform_6, window_bounds = array<i64: 32, 5>}, {pipeline_mode = #tpu.pipeline_mode<synchronous>, transform_indices = @transform_7, window_bounds = array<i64: 1, 5>}, {transform_indices = @transform_8, window_bounds = array<i64: 8, 5>}]} {
    %c0 = arith.constant 0 : index
    %c0_0 = arith.constant 0 : index
    %c0_1 = arith.constant 0 : index
    %0 = vector.load %arg1[%c0, %c0_0, %c0_1] : memref<8x8x64xf32, #tpu.memory_space<vmem>>, vector<8x8x64xf32>
    %1 = vector.shape_cast %0 : vector<8x8x64xf32> to vector<64x64xf32>
    %c0_2 = arith.constant 0 : index
    %c0_3 = arith.constant 0 : index
    %2 = vector.load %arg2[%c0_2, %c0_3] : memref<64x128xf32, #tpu.memory_space<vmem>>, vector<64x128xf32>
    %cst = arith.constant dense<0.000000e+00> : vector<64x128xf32>
    %3 = tpu.matmul %1, %2, %cst {dimension_numbers = #tpu.dot_dimension_numbers<[1], [0], [0], [1], [0, 0, 1, 1], [], []>} : vector<64x64xf32>, vector<64x128xf32>, vector<64x128xf32> -> vector<64x128xf32>
    %c0_4 = arith.constant 0 : index
    %c0_5 = arith.constant 0 : index
    %4 = vector.load %arg4[%c0_4, %c0_5] : memref<1x128xf32, #tpu.memory_space<vmem>>, vector<1x128xf32>
    %5 = vector.broadcast %4 : vector<1x128xf32> to vector<64x128xf32>
    %6 = arith.addf %3, %5 : vector<64x128xf32>
    %cst_6 = arith.constant 0.000000e+00 : f32
    %7 = vector.broadcast %cst_6 : f32 to vector<8x32xf32>
    %cst_7 = arith.constant 0.000000e+00 : f32
    %8 = vector.broadcast %cst_7 : f32 to vector<8x32xf32>
    %cst_8 = arith.constant 0.000000e+00 : f32
    %9 = vector.broadcast %cst_8 : f32 to vector<8x32xf32>
    %cst_9 = arith.constant 0.000000e+00 : f32
    %10 = vector.broadcast %cst_9 : f32 to vector<8x32xf32>
    %11 = vector.extract_strided_slice %6 {offsets = [0, 0], sizes = [8, 128], strides = [1, 1]} : vector<64x128xf32> to vector<8x128xf32>
    %c0_10 = arith.constant 0 : index
    %c0_11 = arith.constant 0 : index
    %12 = vector.load %arg3[%c0_10, %c0_11] : memref<32x128xf32, #tpu.memory_space<vmem>>, vector<32x128xf32>
    %cst_12 = arith.constant dense<0.000000e+00> : vector<8x128xf32>
    %13 = tpu.matmul %7, %12, %cst_12 {dimension_numbers = #tpu.dot_dimension_numbers<[1], [0], [0], [1], [0, 0, 1, 1], [], []>} : vector<8x32xf32>, vector<32x128xf32>, vector<8x128xf32> -> vector<8x128xf32>
    %14 = arith.addf %11, %13 : vector<8x128xf32>
    %15 = arith.negf %14 : vector<8x128xf32>
    %16 = math.exp %15 : vector<8x128xf32>
    %cst_13 = arith.constant 1.000000e+00 : f32
    %17 = vector.broadcast %cst_13 : f32 to vector<8x128xf32>
    %18 = arith.addf %17, %16 : vector<8x128xf32>
    %19 = arith.divf %17, %18 : vector<8x128xf32>
    %20 = math.tanh %14 : vector<8x128xf32>
    %21 = vector.extract_strided_slice %19 {offsets = [0, 0], sizes = [8, 32], strides = [1, 1]} : vector<8x128xf32> to vector<8x32xf32>
    %22 = vector.extract_strided_slice %19 {offsets = [0, 32], sizes = [8, 32], strides = [1, 1]} : vector<8x128xf32> to vector<8x32xf32>
    %23 = vector.extract_strided_slice %20 {offsets = [0, 64], sizes = [8, 32], strides = [1, 1]} : vector<8x128xf32> to vector<8x32xf32>
    %24 = vector.extract_strided_slice %19 {offsets = [0, 96], sizes = [8, 32], strides = [1, 1]} : vector<8x128xf32> to vector<8x32xf32>
    %25 = arith.mulf %22, %8 : vector<8x32xf32>
    %26 = arith.mulf %21, %23 : vector<8x32xf32>
    %27 = arith.addf %25, %26 : vector<8x32xf32>
    %28 = math.tanh %27 : vector<8x32xf32>
    %29 = arith.mulf %24, %28 : vector<8x32xf32>
    %30 = tpu.concatenate %29, %9 in 1 : vector<8x32xf32>, vector<8x32xf32> -> vector<8x64xf32>
    %c0_14 = arith.constant 0 : index
    %c0_15 = arith.constant 0 : index
    %31 = vector.load %arg5[%c0_14, %c0_15] : memref<64x128xf32, #tpu.memory_space<vmem>>, vector<64x128xf32>
    %cst_16 = arith.constant dense<0.000000e+00> : vector<8x128xf32>
    %32 = tpu.matmul %30, %31, %cst_16 {dimension_numbers = #tpu.dot_dimension_numbers<[1], [0], [0], [1], [0, 0, 1, 1], [], []>} : vector<8x64xf32>, vector<64x128xf32>, vector<8x128xf32> -> vector<8x128xf32>
    %c0_17 = arith.constant 0 : index
    %c0_18 = arith.constant 0 : index
    %33 = vector.load %arg6[%c0_17, %c0_18] : memref<1x128xf32, #tpu.memory_space<vmem>>, vector<1x128xf32>
    %34 = vector.broadcast %33 : vector<1x128xf32> to vector<8x128xf32>
    %35 = arith.addf %32, %34 : vector<8x128xf32>
    %36 = arith.negf %35 : vector<8x128xf32>
    %37 = math.exp %36 : vector<8x128xf32>
    %cst_19 = arith.constant 1.000000e+00 : f32
    %38 = vector.broadcast %cst_19 : f32 to vector<8x128xf32>
    %39 = arith.addf %38, %37 : vector<8x128xf32>
    %40 = arith.divf %38, %39 : vector<8x128xf32>
    %41 = math.tanh %35 : vector<8x128xf32>
    %42 = vector.extract_strided_slice %40 {offsets = [0, 0], sizes = [8, 32], strides = [1, 1]} : vector<8x128xf32> to vector<8x32xf32>
    %43 = vector.extract_strided_slice %40 {offsets = [0, 32], sizes = [8, 32], strides = [1, 1]} : vector<8x128xf32> to vector<8x32xf32>
    %44 = vector.extract_strided_slice %41 {offsets = [0, 64], sizes = [8, 32], strides = [1, 1]} : vector<8x128xf32> to vector<8x32xf32>
    %45 = vector.extract_strided_slice %40 {offsets = [0, 96], sizes = [8, 32], strides = [1, 1]} : vector<8x128xf32> to vector<8x32xf32>
    %46 = arith.mulf %43, %10 : vector<8x32xf32>
    %47 = arith.mulf %42, %44 : vector<8x32xf32>
    %48 = arith.addf %46, %47 : vector<8x32xf32>
    %49 = math.tanh %48 : vector<8x32xf32>
    %50 = arith.mulf %45, %49 : vector<8x32xf32>
    %51 = vector.extract_strided_slice %6 {offsets = [8, 0], sizes = [8, 128], strides = [1, 1]} : vector<64x128xf32> to vector<8x128xf32>
    %c0_20 = arith.constant 0 : index
    %c0_21 = arith.constant 0 : index
    %52 = vector.load %arg3[%c0_20, %c0_21] : memref<32x128xf32, #tpu.memory_space<vmem>>, vector<32x128xf32>
    %cst_22 = arith.constant dense<0.000000e+00> : vector<8x128xf32>
    %53 = tpu.matmul %29, %52, %cst_22 {dimension_numbers = #tpu.dot_dimension_numbers<[1], [0], [0], [1], [0, 0, 1, 1], [], []>} : vector<8x32xf32>, vector<32x128xf32>, vector<8x128xf32> -> vector<8x128xf32>
    %54 = arith.addf %51, %53 : vector<8x128xf32>
    %55 = arith.negf %54 : vector<8x128xf32>
    %56 = math.exp %55 : vector<8x128xf32>
    %cst_23 = arith.constant 1.000000e+00 : f32
    %57 = vector.broadcast %cst_23 : f32 to vector<8x128xf32>
    %58 = arith.addf %57, %56 : vector<8x128xf32>
    %59 = arith.divf %57, %58 : vector<8x128xf32>
    %60 = math.tanh %54 : vector<8x128xf32>
    %61 = vector.extract_strided_slice %59 {offsets = [0, 0], sizes = [8, 32], strides = [1, 1]} : vector<8x128xf32> to vector<8x32xf32>
    %62 = vector.extract_strided_slice %59 {offsets = [0, 32], sizes = [8, 32], strides = [1, 1]} : vector<8x128xf32> to vector<8x32xf32>
    %63 = vector.extract_strided_slice %60 {offsets = [0, 64], sizes = [8, 32], strides = [1, 1]} : vector<8x128xf32> to vector<8x32xf32>
    %64 = vector.extract_strided_slice %59 {offsets = [0, 96], sizes = [8, 32], strides = [1, 1]} : vector<8x128xf32> to vector<8x32xf32>
    %65 = arith.mulf %62, %27 : vector<8x32xf32>
    %66 = arith.mulf %61, %63 : vector<8x32xf32>
    %67 = arith.addf %65, %66 : vector<8x32xf32>
    %68 = math.tanh %67 : vector<8x32xf32>
    %69 = arith.mulf %64, %68 : vector<8x32xf32>
    %70 = tpu.concatenate %69, %50 in 1 : vector<8x32xf32>, vector<8x32xf32> -> vector<8x64xf32>
    %c0_24 = arith.constant 0 : index
    %c0_25 = arith.constant 0 : index
    %71 = vector.load %arg5[%c0_24, %c0_25] : memref<64x128xf32, #tpu.memory_space<vmem>>, vector<64x128xf32>
    %cst_26 = arith.constant dense<0.000000e+00> : vector<8x128xf32>
    %72 = tpu.matmul %70, %71, %cst_26 {dimension_numbers = #tpu.dot_dimension_numbers<[1], [0], [0], [1], [0, 0, 1, 1], [], []>} : vector<8x64xf32>, vector<64x128xf32>, vector<8x128xf32> -> vector<8x128xf32>
    %c0_27 = arith.constant 0 : index
    %c0_28 = arith.constant 0 : index
    %73 = vector.load %arg6[%c0_27, %c0_28] : memref<1x128xf32, #tpu.memory_space<vmem>>, vector<1x128xf32>
    %74 = vector.broadcast %73 : vector<1x128xf32> to vector<8x128xf32>
    %75 = arith.addf %72, %74 : vector<8x128xf32>
    %76 = arith.negf %75 : vector<8x128xf32>
    %77 = math.exp %76 : vector<8x128xf32>
    %cst_29 = arith.constant 1.000000e+00 : f32
    %78 = vector.broadcast %cst_29 : f32 to vector<8x128xf32>
    %79 = arith.addf %78, %77 : vector<8x128xf32>
    %80 = arith.divf %78, %79 : vector<8x128xf32>
    %81 = math.tanh %75 : vector<8x128xf32>
    %82 = vector.extract_strided_slice %80 {offsets = [0, 0], sizes = [8, 32], strides = [1, 1]} : vector<8x128xf32> to vector<8x32xf32>
    %83 = vector.extract_strided_slice %80 {offsets = [0, 32], sizes = [8, 32], strides = [1, 1]} : vector<8x128xf32> to vector<8x32xf32>
    %84 = vector.extract_strided_slice %81 {offsets = [0, 64], sizes = [8, 32], strides = [1, 1]} : vector<8x128xf32> to vector<8x32xf32>
    %85 = vector.extract_strided_slice %80 {offsets = [0, 96], sizes = [8, 32], strides = [1, 1]} : vector<8x128xf32> to vector<8x32xf32>
    %86 = arith.mulf %83, %48 : vector<8x32xf32>
    %87 = arith.mulf %82, %84 : vector<8x32xf32>
    %88 = arith.addf %86, %87 : vector<8x32xf32>
    %89 = math.tanh %88 : vector<8x32xf32>
    %90 = arith.mulf %85, %89 : vector<8x32xf32>
    %91 = vector.extract_strided_slice %6 {offsets = [16, 0], sizes = [8, 128], strides = [1, 1]} : vector<64x128xf32> to vector<8x128xf32>
    %c0_30 = arith.constant 0 : index
    %c0_31 = arith.constant 0 : index
    %92 = vector.load %arg3[%c0_30, %c0_31] : memref<32x128xf32, #tpu.memory_space<vmem>>, vector<32x128xf32>
    %cst_32 = arith.constant dense<0.000000e+00> : vector<8x128xf32>
    %93 = tpu.matmul %69, %92, %cst_32 {dimension_numbers = #tpu.dot_dimension_numbers<[1], [0], [0], [1], [0, 0, 1, 1], [], []>} : vector<8x32xf32>, vector<32x128xf32>, vector<8x128xf32> -> vector<8x128xf32>
    %94 = arith.addf %91, %93 : vector<8x128xf32>
    %95 = arith.negf %94 : vector<8x128xf32>
    %96 = math.exp %95 : vector<8x128xf32>
    %cst_33 = arith.constant 1.000000e+00 : f32
    %97 = vector.broadcast %cst_33 : f32 to vector<8x128xf32>
    %98 = arith.addf %97, %96 : vector<8x128xf32>
    %99 = arith.divf %97, %98 : vector<8x128xf32>
    %100 = math.tanh %94 : vector<8x128xf32>
    %101 = vector.extract_strided_slice %99 {offsets = [0, 0], sizes = [8, 32], strides = [1, 1]} : vector<8x128xf32> to vector<8x32xf32>
    %102 = vector.extract_strided_slice %99 {offsets = [0, 32], sizes = [8, 32], strides = [1, 1]} : vector<8x128xf32> to vector<8x32xf32>
    %103 = vector.extract_strided_slice %100 {offsets = [0, 64], sizes = [8, 32], strides = [1, 1]} : vector<8x128xf32> to vector<8x32xf32>
    %104 = vector.extract_strided_slice %99 {offsets = [0, 96], sizes = [8, 32], strides = [1, 1]} : vector<8x128xf32> to vector<8x32xf32>
    %105 = arith.mulf %102, %67 : vector<8x32xf32>
    %106 = arith.mulf %101, %103 : vector<8x32xf32>
    %107 = arith.addf %105, %106 : vector<8x32xf32>
    %108 = math.tanh %107 : vector<8x32xf32>
    %109 = arith.mulf %104, %108 : vector<8x32xf32>
    %110 = tpu.concatenate %109, %90 in 1 : vector<8x32xf32>, vector<8x32xf32> -> vector<8x64xf32>
    %c0_34 = arith.constant 0 : index
    %c0_35 = arith.constant 0 : index
    %111 = vector.load %arg5[%c0_34, %c0_35] : memref<64x128xf32, #tpu.memory_space<vmem>>, vector<64x128xf32>
    %cst_36 = arith.constant dense<0.000000e+00> : vector<8x128xf32>
    %112 = tpu.matmul %110, %111, %cst_36 {dimension_numbers = #tpu.dot_dimension_numbers<[1], [0], [0], [1], [0, 0, 1, 1], [], []>} : vector<8x64xf32>, vector<64x128xf32>, vector<8x128xf32> -> vector<8x128xf32>
    %c0_37 = arith.constant 0 : index
    %c0_38 = arith.constant 0 : index
    %113 = vector.load %arg6[%c0_37, %c0_38] : memref<1x128xf32, #tpu.memory_space<vmem>>, vector<1x128xf32>
    %114 = vector.broadcast %113 : vector<1x128xf32> to vector<8x128xf32>
    %115 = arith.addf %112, %114 : vector<8x128xf32>
    %116 = arith.negf %115 : vector<8x128xf32>
    %117 = math.exp %116 : vector<8x128xf32>
    %cst_39 = arith.constant 1.000000e+00 : f32
    %118 = vector.broadcast %cst_39 : f32 to vector<8x128xf32>
    %119 = arith.addf %118, %117 : vector<8x128xf32>
    %120 = arith.divf %118, %119 : vector<8x128xf32>
    %121 = math.tanh %115 : vector<8x128xf32>
    %122 = vector.extract_strided_slice %120 {offsets = [0, 0], sizes = [8, 32], strides = [1, 1]} : vector<8x128xf32> to vector<8x32xf32>
    %123 = vector.extract_strided_slice %120 {offsets = [0, 32], sizes = [8, 32], strides = [1, 1]} : vector<8x128xf32> to vector<8x32xf32>
    %124 = vector.extract_strided_slice %121 {offsets = [0, 64], sizes = [8, 32], strides = [1, 1]} : vector<8x128xf32> to vector<8x32xf32>
    %125 = vector.extract_strided_slice %120 {offsets = [0, 96], sizes = [8, 32], strides = [1, 1]} : vector<8x128xf32> to vector<8x32xf32>
    %126 = arith.mulf %123, %88 : vector<8x32xf32>
    %127 = arith.mulf %122, %124 : vector<8x32xf32>
    %128 = arith.addf %126, %127 : vector<8x32xf32>
    %129 = math.tanh %128 : vector<8x32xf32>
    %130 = arith.mulf %125, %129 : vector<8x32xf32>
    %131 = vector.extract_strided_slice %6 {offsets = [24, 0], sizes = [8, 128], strides = [1, 1]} : vector<64x128xf32> to vector<8x128xf32>
    %c0_40 = arith.constant 0 : index
    %c0_41 = arith.constant 0 : index
    %132 = vector.load %arg3[%c0_40, %c0_41] : memref<32x128xf32, #tpu.memory_space<vmem>>, vector<32x128xf32>
    %cst_42 = arith.constant dense<0.000000e+00> : vector<8x128xf32>
    %133 = tpu.matmul %109, %132, %cst_42 {dimension_numbers = #tpu.dot_dimension_numbers<[1], [0], [0], [1], [0, 0, 1, 1], [], []>} : vector<8x32xf32>, vector<32x128xf32>, vector<8x128xf32> -> vector<8x128xf32>
    %134 = arith.addf %131, %133 : vector<8x128xf32>
    %135 = arith.negf %134 : vector<8x128xf32>
    %136 = math.exp %135 : vector<8x128xf32>
    %cst_43 = arith.constant 1.000000e+00 : f32
    %137 = vector.broadcast %cst_43 : f32 to vector<8x128xf32>
    %138 = arith.addf %137, %136 : vector<8x128xf32>
    %139 = arith.divf %137, %138 : vector<8x128xf32>
    %140 = math.tanh %134 : vector<8x128xf32>
    %141 = vector.extract_strided_slice %139 {offsets = [0, 0], sizes = [8, 32], strides = [1, 1]} : vector<8x128xf32> to vector<8x32xf32>
    %142 = vector.extract_strided_slice %139 {offsets = [0, 32], sizes = [8, 32], strides = [1, 1]} : vector<8x128xf32> to vector<8x32xf32>
    %143 = vector.extract_strided_slice %140 {offsets = [0, 64], sizes = [8, 32], strides = [1, 1]} : vector<8x128xf32> to vector<8x32xf32>
    %144 = vector.extract_strided_slice %139 {offsets = [0, 96], sizes = [8, 32], strides = [1, 1]} : vector<8x128xf32> to vector<8x32xf32>
    %145 = arith.mulf %142, %107 : vector<8x32xf32>
    %146 = arith.mulf %141, %143 : vector<8x32xf32>
    %147 = arith.addf %145, %146 : vector<8x32xf32>
    %148 = math.tanh %147 : vector<8x32xf32>
    %149 = arith.mulf %144, %148 : vector<8x32xf32>
    %150 = tpu.concatenate %149, %130 in 1 : vector<8x32xf32>, vector<8x32xf32> -> vector<8x64xf32>
    %c0_44 = arith.constant 0 : index
    %c0_45 = arith.constant 0 : index
    %151 = vector.load %arg5[%c0_44, %c0_45] : memref<64x128xf32, #tpu.memory_space<vmem>>, vector<64x128xf32>
    %cst_46 = arith.constant dense<0.000000e+00> : vector<8x128xf32>
    %152 = tpu.matmul %150, %151, %cst_46 {dimension_numbers = #tpu.dot_dimension_numbers<[1], [0], [0], [1], [0, 0, 1, 1], [], []>} : vector<8x64xf32>, vector<64x128xf32>, vector<8x128xf32> -> vector<8x128xf32>
    %c0_47 = arith.constant 0 : index
    %c0_48 = arith.constant 0 : index
    %153 = vector.load %arg6[%c0_47, %c0_48] : memref<1x128xf32, #tpu.memory_space<vmem>>, vector<1x128xf32>
    %154 = vector.broadcast %153 : vector<1x128xf32> to vector<8x128xf32>
    %155 = arith.addf %152, %154 : vector<8x128xf32>
    %156 = arith.negf %155 : vector<8x128xf32>
    %157 = math.exp %156 : vector<8x128xf32>
    %cst_49 = arith.constant 1.000000e+00 : f32
    %158 = vector.broadcast %cst_49 : f32 to vector<8x128xf32>
    %159 = arith.addf %158, %157 : vector<8x128xf32>
    %160 = arith.divf %158, %159 : vector<8x128xf32>
    %161 = math.tanh %155 : vector<8x128xf32>
    %162 = vector.extract_strided_slice %160 {offsets = [0, 0], sizes = [8, 32], strides = [1, 1]} : vector<8x128xf32> to vector<8x32xf32>
    %163 = vector.extract_strided_slice %160 {offsets = [0, 32], sizes = [8, 32], strides = [1, 1]} : vector<8x128xf32> to vector<8x32xf32>
    %164 = vector.extract_strided_slice %161 {offsets = [0, 64], sizes = [8, 32], strides = [1, 1]} : vector<8x128xf32> to vector<8x32xf32>
    %165 = vector.extract_strided_slice %160 {offsets = [0, 96], sizes = [8, 32], strides = [1, 1]} : vector<8x128xf32> to vector<8x32xf32>
    %166 = arith.mulf %163, %128 : vector<8x32xf32>
    %167 = arith.mulf %162, %164 : vector<8x32xf32>
    %168 = arith.addf %166, %167 : vector<8x32xf32>
    %169 = math.tanh %168 : vector<8x32xf32>
    %170 = arith.mulf %165, %169 : vector<8x32xf32>
    %171 = vector.extract_strided_slice %6 {offsets = [32, 0], sizes = [8, 128], strides = [1, 1]} : vector<64x128xf32> to vector<8x128xf32>
    %c0_50 = arith.constant 0 : index
    %c0_51 = arith.constant 0 : index
    %172 = vector.load %arg3[%c0_50, %c0_51] : memref<32x128xf32, #tpu.memory_space<vmem>>, vector<32x128xf32>
    %cst_52 = arith.constant dense<0.000000e+00> : vector<8x128xf32>
    %173 = tpu.matmul %149, %172, %cst_52 {dimension_numbers = #tpu.dot_dimension_numbers<[1], [0], [0], [1], [0, 0, 1, 1], [], []>} : vector<8x32xf32>, vector<32x128xf32>, vector<8x128xf32> -> vector<8x128xf32>
    %174 = arith.addf %171, %173 : vector<8x128xf32>
    %175 = arith.negf %174 : vector<8x128xf32>
    %176 = math.exp %175 : vector<8x128xf32>
    %cst_53 = arith.constant 1.000000e+00 : f32
    %177 = vector.broadcast %cst_53 : f32 to vector<8x128xf32>
    %178 = arith.addf %177, %176 : vector<8x128xf32>
    %179 = arith.divf %177, %178 : vector<8x128xf32>
    %180 = math.tanh %174 : vector<8x128xf32>
    %181 = vector.extract_strided_slice %179 {offsets = [0, 0], sizes = [8, 32], strides = [1, 1]} : vector<8x128xf32> to vector<8x32xf32>
    %182 = vector.extract_strided_slice %179 {offsets = [0, 32], sizes = [8, 32], strides = [1, 1]} : vector<8x128xf32> to vector<8x32xf32>
    %183 = vector.extract_strided_slice %180 {offsets = [0, 64], sizes = [8, 32], strides = [1, 1]} : vector<8x128xf32> to vector<8x32xf32>
    %184 = vector.extract_strided_slice %179 {offsets = [0, 96], sizes = [8, 32], strides = [1, 1]} : vector<8x128xf32> to vector<8x32xf32>
    %185 = arith.mulf %182, %147 : vector<8x32xf32>
    %186 = arith.mulf %181, %183 : vector<8x32xf32>
    %187 = arith.addf %185, %186 : vector<8x32xf32>
    %188 = math.tanh %187 : vector<8x32xf32>
    %189 = arith.mulf %184, %188 : vector<8x32xf32>
    %190 = tpu.concatenate %189, %170 in 1 : vector<8x32xf32>, vector<8x32xf32> -> vector<8x64xf32>
    %c0_54 = arith.constant 0 : index
    %c0_55 = arith.constant 0 : index
    %191 = vector.load %arg5[%c0_54, %c0_55] : memref<64x128xf32, #tpu.memory_space<vmem>>, vector<64x128xf32>
    %cst_56 = arith.constant dense<0.000000e+00> : vector<8x128xf32>
    %192 = tpu.matmul %190, %191, %cst_56 {dimension_numbers = #tpu.dot_dimension_numbers<[1], [0], [0], [1], [0, 0, 1, 1], [], []>} : vector<8x64xf32>, vector<64x128xf32>, vector<8x128xf32> -> vector<8x128xf32>
    %c0_57 = arith.constant 0 : index
    %c0_58 = arith.constant 0 : index
    %193 = vector.load %arg6[%c0_57, %c0_58] : memref<1x128xf32, #tpu.memory_space<vmem>>, vector<1x128xf32>
    %194 = vector.broadcast %193 : vector<1x128xf32> to vector<8x128xf32>
    %195 = arith.addf %192, %194 : vector<8x128xf32>
    %196 = arith.negf %195 : vector<8x128xf32>
    %197 = math.exp %196 : vector<8x128xf32>
    %cst_59 = arith.constant 1.000000e+00 : f32
    %198 = vector.broadcast %cst_59 : f32 to vector<8x128xf32>
    %199 = arith.addf %198, %197 : vector<8x128xf32>
    %200 = arith.divf %198, %199 : vector<8x128xf32>
    %201 = math.tanh %195 : vector<8x128xf32>
    %202 = vector.extract_strided_slice %200 {offsets = [0, 0], sizes = [8, 32], strides = [1, 1]} : vector<8x128xf32> to vector<8x32xf32>
    %203 = vector.extract_strided_slice %200 {offsets = [0, 32], sizes = [8, 32], strides = [1, 1]} : vector<8x128xf32> to vector<8x32xf32>
    %204 = vector.extract_strided_slice %201 {offsets = [0, 64], sizes = [8, 32], strides = [1, 1]} : vector<8x128xf32> to vector<8x32xf32>
    %205 = vector.extract_strided_slice %200 {offsets = [0, 96], sizes = [8, 32], strides = [1, 1]} : vector<8x128xf32> to vector<8x32xf32>
    %206 = arith.mulf %203, %168 : vector<8x32xf32>
    %207 = arith.mulf %202, %204 : vector<8x32xf32>
    %208 = arith.addf %206, %207 : vector<8x32xf32>
    %209 = math.tanh %208 : vector<8x32xf32>
    %210 = arith.mulf %205, %209 : vector<8x32xf32>
    %211 = vector.extract_strided_slice %6 {offsets = [40, 0], sizes = [8, 128], strides = [1, 1]} : vector<64x128xf32> to vector<8x128xf32>
    %c0_60 = arith.constant 0 : index
    %c0_61 = arith.constant 0 : index
    %212 = vector.load %arg3[%c0_60, %c0_61] : memref<32x128xf32, #tpu.memory_space<vmem>>, vector<32x128xf32>
    %cst_62 = arith.constant dense<0.000000e+00> : vector<8x128xf32>
    %213 = tpu.matmul %189, %212, %cst_62 {dimension_numbers = #tpu.dot_dimension_numbers<[1], [0], [0], [1], [0, 0, 1, 1], [], []>} : vector<8x32xf32>, vector<32x128xf32>, vector<8x128xf32> -> vector<8x128xf32>
    %214 = arith.addf %211, %213 : vector<8x128xf32>
    %215 = arith.negf %214 : vector<8x128xf32>
    %216 = math.exp %215 : vector<8x128xf32>
    %cst_63 = arith.constant 1.000000e+00 : f32
    %217 = vector.broadcast %cst_63 : f32 to vector<8x128xf32>
    %218 = arith.addf %217, %216 : vector<8x128xf32>
    %219 = arith.divf %217, %218 : vector<8x128xf32>
    %220 = math.tanh %214 : vector<8x128xf32>
    %221 = vector.extract_strided_slice %219 {offsets = [0, 0], sizes = [8, 32], strides = [1, 1]} : vector<8x128xf32> to vector<8x32xf32>
    %222 = vector.extract_strided_slice %219 {offsets = [0, 32], sizes = [8, 32], strides = [1, 1]} : vector<8x128xf32> to vector<8x32xf32>
    %223 = vector.extract_strided_slice %220 {offsets = [0, 64], sizes = [8, 32], strides = [1, 1]} : vector<8x128xf32> to vector<8x32xf32>
    %224 = vector.extract_strided_slice %219 {offsets = [0, 96], sizes = [8, 32], strides = [1, 1]} : vector<8x128xf32> to vector<8x32xf32>
    %225 = arith.mulf %222, %187 : vector<8x32xf32>
    %226 = arith.mulf %221, %223 : vector<8x32xf32>
    %227 = arith.addf %225, %226 : vector<8x32xf32>
    %228 = math.tanh %227 : vector<8x32xf32>
    %229 = arith.mulf %224, %228 : vector<8x32xf32>
    %230 = tpu.concatenate %229, %210 in 1 : vector<8x32xf32>, vector<8x32xf32> -> vector<8x64xf32>
    %c0_64 = arith.constant 0 : index
    %c0_65 = arith.constant 0 : index
    %231 = vector.load %arg5[%c0_64, %c0_65] : memref<64x128xf32, #tpu.memory_space<vmem>>, vector<64x128xf32>
    %cst_66 = arith.constant dense<0.000000e+00> : vector<8x128xf32>
    %232 = tpu.matmul %230, %231, %cst_66 {dimension_numbers = #tpu.dot_dimension_numbers<[1], [0], [0], [1], [0, 0, 1, 1], [], []>} : vector<8x64xf32>, vector<64x128xf32>, vector<8x128xf32> -> vector<8x128xf32>
    %c0_67 = arith.constant 0 : index
    %c0_68 = arith.constant 0 : index
    %233 = vector.load %arg6[%c0_67, %c0_68] : memref<1x128xf32, #tpu.memory_space<vmem>>, vector<1x128xf32>
    %234 = vector.broadcast %233 : vector<1x128xf32> to vector<8x128xf32>
    %235 = arith.addf %232, %234 : vector<8x128xf32>
    %236 = arith.negf %235 : vector<8x128xf32>
    %237 = math.exp %236 : vector<8x128xf32>
    %cst_69 = arith.constant 1.000000e+00 : f32
    %238 = vector.broadcast %cst_69 : f32 to vector<8x128xf32>
    %239 = arith.addf %238, %237 : vector<8x128xf32>
    %240 = arith.divf %238, %239 : vector<8x128xf32>
    %241 = math.tanh %235 : vector<8x128xf32>
    %242 = vector.extract_strided_slice %240 {offsets = [0, 0], sizes = [8, 32], strides = [1, 1]} : vector<8x128xf32> to vector<8x32xf32>
    %243 = vector.extract_strided_slice %240 {offsets = [0, 32], sizes = [8, 32], strides = [1, 1]} : vector<8x128xf32> to vector<8x32xf32>
    %244 = vector.extract_strided_slice %241 {offsets = [0, 64], sizes = [8, 32], strides = [1, 1]} : vector<8x128xf32> to vector<8x32xf32>
    %245 = vector.extract_strided_slice %240 {offsets = [0, 96], sizes = [8, 32], strides = [1, 1]} : vector<8x128xf32> to vector<8x32xf32>
    %246 = arith.mulf %243, %208 : vector<8x32xf32>
    %247 = arith.mulf %242, %244 : vector<8x32xf32>
    %248 = arith.addf %246, %247 : vector<8x32xf32>
    %249 = math.tanh %248 : vector<8x32xf32>
    %250 = arith.mulf %245, %249 : vector<8x32xf32>
    %251 = vector.extract_strided_slice %6 {offsets = [48, 0], sizes = [8, 128], strides = [1, 1]} : vector<64x128xf32> to vector<8x128xf32>
    %c0_70 = arith.constant 0 : index
    %c0_71 = arith.constant 0 : index
    %252 = vector.load %arg3[%c0_70, %c0_71] : memref<32x128xf32, #tpu.memory_space<vmem>>, vector<32x128xf32>
    %cst_72 = arith.constant dense<0.000000e+00> : vector<8x128xf32>
    %253 = tpu.matmul %229, %252, %cst_72 {dimension_numbers = #tpu.dot_dimension_numbers<[1], [0], [0], [1], [0, 0, 1, 1], [], []>} : vector<8x32xf32>, vector<32x128xf32>, vector<8x128xf32> -> vector<8x128xf32>
    %254 = arith.addf %251, %253 : vector<8x128xf32>
    %255 = arith.negf %254 : vector<8x128xf32>
    %256 = math.exp %255 : vector<8x128xf32>
    %cst_73 = arith.constant 1.000000e+00 : f32
    %257 = vector.broadcast %cst_73 : f32 to vector<8x128xf32>
    %258 = arith.addf %257, %256 : vector<8x128xf32>
    %259 = arith.divf %257, %258 : vector<8x128xf32>
    %260 = math.tanh %254 : vector<8x128xf32>
    %261 = vector.extract_strided_slice %259 {offsets = [0, 0], sizes = [8, 32], strides = [1, 1]} : vector<8x128xf32> to vector<8x32xf32>
    %262 = vector.extract_strided_slice %259 {offsets = [0, 32], sizes = [8, 32], strides = [1, 1]} : vector<8x128xf32> to vector<8x32xf32>
    %263 = vector.extract_strided_slice %260 {offsets = [0, 64], sizes = [8, 32], strides = [1, 1]} : vector<8x128xf32> to vector<8x32xf32>
    %264 = vector.extract_strided_slice %259 {offsets = [0, 96], sizes = [8, 32], strides = [1, 1]} : vector<8x128xf32> to vector<8x32xf32>
    %265 = arith.mulf %262, %227 : vector<8x32xf32>
    %266 = arith.mulf %261, %263 : vector<8x32xf32>
    %267 = arith.addf %265, %266 : vector<8x32xf32>
    %268 = math.tanh %267 : vector<8x32xf32>
    %269 = arith.mulf %264, %268 : vector<8x32xf32>
    %270 = tpu.concatenate %269, %250 in 1 : vector<8x32xf32>, vector<8x32xf32> -> vector<8x64xf32>
    %c0_74 = arith.constant 0 : index
    %c0_75 = arith.constant 0 : index
    %271 = vector.load %arg5[%c0_74, %c0_75] : memref<64x128xf32, #tpu.memory_space<vmem>>, vector<64x128xf32>
    %cst_76 = arith.constant dense<0.000000e+00> : vector<8x128xf32>
    %272 = tpu.matmul %270, %271, %cst_76 {dimension_numbers = #tpu.dot_dimension_numbers<[1], [0], [0], [1], [0, 0, 1, 1], [], []>} : vector<8x64xf32>, vector<64x128xf32>, vector<8x128xf32> -> vector<8x128xf32>
    %c0_77 = arith.constant 0 : index
    %c0_78 = arith.constant 0 : index
    %273 = vector.load %arg6[%c0_77, %c0_78] : memref<1x128xf32, #tpu.memory_space<vmem>>, vector<1x128xf32>
    %274 = vector.broadcast %273 : vector<1x128xf32> to vector<8x128xf32>
    %275 = arith.addf %272, %274 : vector<8x128xf32>
    %276 = arith.negf %275 : vector<8x128xf32>
    %277 = math.exp %276 : vector<8x128xf32>
    %cst_79 = arith.constant 1.000000e+00 : f32
    %278 = vector.broadcast %cst_79 : f32 to vector<8x128xf32>
    %279 = arith.addf %278, %277 : vector<8x128xf32>
    %280 = arith.divf %278, %279 : vector<8x128xf32>
    %281 = math.tanh %275 : vector<8x128xf32>
    %282 = vector.extract_strided_slice %280 {offsets = [0, 0], sizes = [8, 32], strides = [1, 1]} : vector<8x128xf32> to vector<8x32xf32>
    %283 = vector.extract_strided_slice %280 {offsets = [0, 32], sizes = [8, 32], strides = [1, 1]} : vector<8x128xf32> to vector<8x32xf32>
    %284 = vector.extract_strided_slice %281 {offsets = [0, 64], sizes = [8, 32], strides = [1, 1]} : vector<8x128xf32> to vector<8x32xf32>
    %285 = vector.extract_strided_slice %280 {offsets = [0, 96], sizes = [8, 32], strides = [1, 1]} : vector<8x128xf32> to vector<8x32xf32>
    %286 = arith.mulf %283, %248 : vector<8x32xf32>
    %287 = arith.mulf %282, %284 : vector<8x32xf32>
    %288 = arith.addf %286, %287 : vector<8x32xf32>
    %289 = math.tanh %288 : vector<8x32xf32>
    %290 = arith.mulf %285, %289 : vector<8x32xf32>
    %291 = vector.extract_strided_slice %6 {offsets = [56, 0], sizes = [8, 128], strides = [1, 1]} : vector<64x128xf32> to vector<8x128xf32>
    %c0_80 = arith.constant 0 : index
    %c0_81 = arith.constant 0 : index
    %292 = vector.load %arg3[%c0_80, %c0_81] : memref<32x128xf32, #tpu.memory_space<vmem>>, vector<32x128xf32>
    %cst_82 = arith.constant dense<0.000000e+00> : vector<8x128xf32>
    %293 = tpu.matmul %269, %292, %cst_82 {dimension_numbers = #tpu.dot_dimension_numbers<[1], [0], [0], [1], [0, 0, 1, 1], [], []>} : vector<8x32xf32>, vector<32x128xf32>, vector<8x128xf32> -> vector<8x128xf32>
    %294 = arith.addf %291, %293 : vector<8x128xf32>
    %295 = arith.negf %294 : vector<8x128xf32>
    %296 = math.exp %295 : vector<8x128xf32>
    %cst_83 = arith.constant 1.000000e+00 : f32
    %297 = vector.broadcast %cst_83 : f32 to vector<8x128xf32>
    %298 = arith.addf %297, %296 : vector<8x128xf32>
    %299 = arith.divf %297, %298 : vector<8x128xf32>
    %300 = math.tanh %294 : vector<8x128xf32>
    %301 = vector.extract_strided_slice %299 {offsets = [0, 0], sizes = [8, 32], strides = [1, 1]} : vector<8x128xf32> to vector<8x32xf32>
    %302 = vector.extract_strided_slice %299 {offsets = [0, 32], sizes = [8, 32], strides = [1, 1]} : vector<8x128xf32> to vector<8x32xf32>
    %303 = vector.extract_strided_slice %300 {offsets = [0, 64], sizes = [8, 32], strides = [1, 1]} : vector<8x128xf32> to vector<8x32xf32>
    %304 = vector.extract_strided_slice %299 {offsets = [0, 96], sizes = [8, 32], strides = [1, 1]} : vector<8x128xf32> to vector<8x32xf32>
    %305 = arith.mulf %302, %267 : vector<8x32xf32>
    %306 = arith.mulf %301, %303 : vector<8x32xf32>
    %307 = arith.addf %305, %306 : vector<8x32xf32>
    %308 = math.tanh %307 : vector<8x32xf32>
    %309 = arith.mulf %304, %308 : vector<8x32xf32>
    %310 = tpu.concatenate %309, %290 in 1 : vector<8x32xf32>, vector<8x32xf32> -> vector<8x64xf32>
    %c0_84 = arith.constant 0 : index
    %c0_85 = arith.constant 0 : index
    %311 = vector.load %arg5[%c0_84, %c0_85] : memref<64x128xf32, #tpu.memory_space<vmem>>, vector<64x128xf32>
    %cst_86 = arith.constant dense<0.000000e+00> : vector<8x128xf32>
    %312 = tpu.matmul %310, %311, %cst_86 {dimension_numbers = #tpu.dot_dimension_numbers<[1], [0], [0], [1], [0, 0, 1, 1], [], []>} : vector<8x64xf32>, vector<64x128xf32>, vector<8x128xf32> -> vector<8x128xf32>
    %c0_87 = arith.constant 0 : index
    %c0_88 = arith.constant 0 : index
    %313 = vector.load %arg6[%c0_87, %c0_88] : memref<1x128xf32, #tpu.memory_space<vmem>>, vector<1x128xf32>
    %314 = vector.broadcast %313 : vector<1x128xf32> to vector<8x128xf32>
    %315 = arith.addf %312, %314 : vector<8x128xf32>
    %316 = arith.negf %315 : vector<8x128xf32>
    %317 = math.exp %316 : vector<8x128xf32>
    %cst_89 = arith.constant 1.000000e+00 : f32
    %318 = vector.broadcast %cst_89 : f32 to vector<8x128xf32>
    %319 = arith.addf %318, %317 : vector<8x128xf32>
    %320 = arith.divf %318, %319 : vector<8x128xf32>
    %321 = math.tanh %315 : vector<8x128xf32>
    %322 = vector.extract_strided_slice %320 {offsets = [0, 0], sizes = [8, 32], strides = [1, 1]} : vector<8x128xf32> to vector<8x32xf32>
    %323 = vector.extract_strided_slice %320 {offsets = [0, 32], sizes = [8, 32], strides = [1, 1]} : vector<8x128xf32> to vector<8x32xf32>
    %324 = vector.extract_strided_slice %321 {offsets = [0, 64], sizes = [8, 32], strides = [1, 1]} : vector<8x128xf32> to vector<8x32xf32>
    %325 = vector.extract_strided_slice %320 {offsets = [0, 96], sizes = [8, 32], strides = [1, 1]} : vector<8x128xf32> to vector<8x32xf32>
    %326 = arith.mulf %323, %288 : vector<8x32xf32>
    %327 = arith.mulf %322, %324 : vector<8x32xf32>
    %328 = arith.addf %326, %327 : vector<8x32xf32>
    %329 = math.tanh %328 : vector<8x32xf32>
    %330 = arith.mulf %325, %329 : vector<8x32xf32>
    %c0_90 = arith.constant 0 : index
    %c0_91 = arith.constant 0 : index
    %331 = vector.load %arg7[%c0_90, %c0_91] : memref<32x5xf32, #tpu.memory_space<vmem>>, vector<32x5xf32>
    %cst_92 = arith.constant dense<0.000000e+00> : vector<8x5xf32>
    %332 = tpu.matmul %330, %331, %cst_92 {dimension_numbers = #tpu.dot_dimension_numbers<[1], [0], [0], [1], [0, 0, 1, 1], [], []>} : vector<8x32xf32>, vector<32x5xf32>, vector<8x5xf32> -> vector<8x5xf32>
    %c0_93 = arith.constant 0 : index
    %c0_94 = arith.constant 0 : index
    %333 = vector.load %arg8[%c0_93, %c0_94] : memref<1x5xf32, #tpu.memory_space<vmem>>, vector<1x5xf32>
    %334 = vector.broadcast %333 : vector<1x5xf32> to vector<8x5xf32>
    %335 = arith.addf %332, %334 : vector<8x5xf32>
    %c0_95 = arith.constant 0 : index
    %c0_96 = arith.constant 0 : index
    %336 = vector.load %arg9[%c0_95, %c0_96] : memref<8x5xf32, #tpu.memory_space<vmem>>, vector<8x5xf32>
    tpu.vector_store %arg9[%c0_95, %c0_96], %335 {strides = array<i32>} : memref<8x5xf32, #tpu.memory_space<vmem>>, vector<8x5xf32>,
    return
  }
  func.func @transform_0(%arg0: i32) -> (i32, i32, i32) {
    %c0_i32 = arith.constant 0 : i32
    %c0_i32_0 = arith.constant 0 : i32
    %c0_i32_1 = arith.constant 0 : i32
    return %c0_i32, %arg0, %c0_i32_0 : i32, i32, i32
  }
  func.func @transform_1(%arg0: i32) -> (i32, i32) {
    %c0_i32 = arith.constant 0 : i32
    %c0_i32_0 = arith.constant 0 : i32
    %c0_i32_1 = arith.constant 0 : i32
    return %c0_i32, %c0_i32_0 : i32, i32
  }
  func.func @transform_2(%arg0: i32) -> (i32, i32) {
    %c0_i32 = arith.constant 0 : i32
    %c0_i32_0 = arith.constant 0 : i32
    %c0_i32_1 = arith.constant 0 : i32
    return %c0_i32, %c0_i32_0 : i32, i32
  }
  func.func @transform_3(%arg0: i32) -> (i32, i32) {
    %c0_i32 = arith.constant 0 : i32
    %c0_i32_0 = arith.constant 0 : i32
    %c0_i32_1 = arith.constant 0 : i32
    return %c0_i32, %c0_i32_0 : i32, i32
  }
  func.func @transform_4(%arg0: i32) -> (i32, i32) {
    %c0_i32 = arith.constant 0 : i32
    %c0_i32_0 = arith.constant 0 : i32
    %c0_i32_1 = arith.constant 0 : i32
    return %c0_i32, %c0_i32_0 : i32, i32
  }
  func.func @transform_5(%arg0: i32) -> (i32, i32) {
    %c0_i32 = arith.constant 0 : i32
    %c0_i32_0 = arith.constant 0 : i32
    %c0_i32_1 = arith.constant 0 : i32
    return %c0_i32, %c0_i32_0 : i32, i32
  }
  func.func @transform_6(%arg0: i32) -> (i32, i32) {
    %c0_i32 = arith.constant 0 : i32
    %c0_i32_0 = arith.constant 0 : i32
    %c0_i32_1 = arith.constant 0 : i32
    return %c0_i32, %c0_i32_0 : i32, i32
  }
  func.func @transform_7(%arg0: i32) -> (i32, i32) {
    %c0_i32 = arith.constant 0 : i32
    %c0_i32_0 = arith.constant 0 : i32
    %c0_i32_1 = arith.constant 0 : i32
    return %c0_i32, %c0_i32_0 : i32, i32
  }
  func.func @transform_8(%arg0: i32) -> (i32, i32) {
    %c0_i32 = arith.constant 0 : i32
    %c0_i32_0 = arith.constant 0 : i32
    return %arg0, %c0_i32 : i32, i32
  }
}

</mosaic_0001>

<llo_original>
// kernel: tpu_custom_call.1
$region0: #{tpu_custom_call.1}
  #allocation0 [shape = 'u32[]', space=smem, size = 0x4, offset = 0x4, fixed_abs, tag = 'smem constant byte address 0x4 - core index']
  #allocation1 [shape = 'u32[72,128]{1,0:T(1,128)}', space=vmem, size = 0x9000, scoped, tag = 'internal scratch']
  %s0 = inlined_call_operand.hbm [shape: f32[8,8,64], index: 0, kind: input, shape index: {}]
  %s1 = inlined_call_operand.hbm [shape: f32[64,128], index: 1, kind: input, shape index: {}]
  %s2 = inlined_call_operand.vmem [shape: f32[32,128], index: 2, kind: input, shape index: {}]
  %s3 = inlined_call_operand.vmem [shape: f32[1,128], index: 3, kind: input, shape index: {}]
  %s4 = inlined_call_operand.hbm [shape: f32[64,128], index: 4, kind: input, shape index: {}]
  %s5 = inlined_call_operand.vmem [shape: f32[1,128], index: 5, kind: input, shape index: {}]
  %s6 = inlined_call_operand.vmem [shape: f32[32,5], index: 6, kind: input, shape index: {}]
  %s7 = inlined_call_operand.vmem [shape: f32[1,5], index: 7, kind: input, shape index: {}]
  %s8 = inlined_call_operand.hbm [shape: f32[8,5], index: 8, kind: output, shape index: {}]
  %s9 = sld [smem:[#allocation0]]
  $region54: #{tpu_custom_call.1} parent=0
    _
  %s11 = ssub.s32 1, %s9
  %s12 = scalar_select 0, %s11, %s9
  $region1: #{tpu_custom_call.1} parent=0
    #allocation2 [shape = 'u8[32768]{0}', space=vmem, size = 0x8000, scoped, tag = 'input window, operand 0, single buffered']
    #allocation3 [shape = 's32[1]{0}', space=sflag, size = 0x4, scoped, tag = 'scoped memory for tpu_custom_call.1']
    #allocation4 [shape = 's32[1]{0}', space=sflag, size = 0x4, scoped, tag = 'scoped memory for tpu_custom_call.1']
    #allocation5 [shape = 'u8[32768]{0}', space=vmem, size = 0x8000, scoped, tag = 'input window, operand 1, single buffered']
    #allocation6 [shape = 's32[1]{0}', space=sflag, size = 0x4, scoped, tag = 'scoped memory for tpu_custom_call.1']
    #allocation7 [shape = 'u8[32768]{0}', space=vmem, size = 0x8000, scoped, tag = 'input window, operand 4, single buffered']
    #allocation8 [shape = 'u8[4096]{0}', space=vmem, size = 0x1000, scoped, tag = 'output window, operand 0, single buffered']
    %13 = vsyncpa [#allocation3], 0
    %14 = vsyncpa [#allocation6], 0
    %15 = vsyncpa [#allocation4], 0
    // Predicated region
    $region2: #{tpu_custom_call.1} parent=1 // pred_check
      _
    $region3: #{tpu_custom_call.1} parent=1 // pred_check_branch
      %17 = sbr.rel (0) target = $region5
    $region4: #{tpu_custom_call.1} parent=1 // pred_region
      %19 = vsyncadd [#allocation3], 0
      %s20 = sshll.u32 %s0, 4
      %s21 = int_to_ptr.hbm [resolvable:$true] %s20
      %s22 = sshll.u32 [#allocation2], 4
      %s23 = int_to_ptr.vmem [resolvable:$true] %s22
      %28 = dma.hbm_to_vmem [thread:$0]  %s21, 1024, %s23, [#allocation3], 128, 128, 8
    $region5: #{tpu_custom_call.1} parent=1 // pred_fallthru
      _
    // Predicated region
    $region6: #{tpu_custom_call.1} parent=1 // pred_check
      _
    $region7: #{tpu_custom_call.1} parent=1 // pred_check_branch
      %30 = sbr.rel (0) target = $region9
    $region8: #{tpu_custom_call.1} parent=1 // pred_region
      %32 = vsyncadd [#allocation6], 0
      %s33 = sshll.u32 %s1, 4
      %s34 = int_to_ptr.hbm [resolvable:$true] %s33
      %s35 = sshll.u32 [#allocation5], 4
      %s36 = int_to_ptr.vmem [resolvable:$true] %s35
      %41 = dma.hbm_to_vmem [thread:$0]  %s34, 1024, %s36, [#allocation6], 128, 128, 8
    $region9: #{tpu_custom_call.1} parent=1 // pred_fallthru
      _
    // Predicated region
    $region10: #{tpu_custom_call.1} parent=1 // pred_check
      _
    $region11: #{tpu_custom_call.1} parent=1 // pred_check_branch
      %43 = sbr.rel (0) target = $region13
    $region12: #{tpu_custom_call.1} parent=1 // pred_region
      _
    $region13: #{tpu_custom_call.1} parent=1 // pred_fallthru
      _
    // Predicated region
    $region14: #{tpu_custom_call.1} parent=1 // pred_check
      _
    $region15: #{tpu_custom_call.1} parent=1 // pred_check_branch
      %45 = sbr.rel (0) target = $region17
    $region16: #{tpu_custom_call.1} parent=1 // pred_region
      _
    $region17: #{tpu_custom_call.1} parent=1 // pred_fallthru
      _
    // Predicated region
    $region18: #{tpu_custom_call.1} parent=1 // pred_check
      _
    $region19: #{tpu_custom_call.1} parent=1 // pred_check_branch
      %47 = sbr.rel (0) target = $region21
    $region20: #{tpu_custom_call.1} parent=1 // pred_region
      %49 = vsyncadd [#allocation6], 0
      %s50 = sshll.u32 %s4, 4
      %s51 = int_to_ptr.hbm [resolvable:$true] %s50
      %s52 = sshll.u32 [#allocation7], 4
      %s53 = int_to_ptr.vmem [resolvable:$true] %s52
      %58 = dma.hbm_to_vmem [thread:$0]  %s51, 1024, %s53, [#allocation6], 128, 128, 8
    $region21: #{tpu_custom_call.1} parent=1 // pred_fallthru
      _
    // Predicated region
    $region22: #{tpu_custom_call.1} parent=1 // pred_check
      _
    $region23: #{tpu_custom_call.1} parent=1 // pred_check_branch
      %60 = sbr.rel (0) target = $region25
    $region24: #{tpu_custom_call.1} parent=1 // pred_region
      _
    $region25: #{tpu_custom_call.1} parent=1 // pred_fallthru
      _
    // Predicated region
    $region26: #{tpu_custom_call.1} parent=1 // pred_check
      _
    $region27: #{tpu_custom_call.1} parent=1 // pred_check_branch
      %62 = sbr.rel (0) target = $region29
    $region28: #{tpu_custom_call.1} parent=1 // pred_region
      _
    $region29: #{tpu_custom_call.1} parent=1 // pred_fallthru
      _
    // Predicated region
    $region30: #{tpu_custom_call.1} parent=1 // pred_check
      _
    $region31: #{tpu_custom_call.1} parent=1 // pred_check_branch
      %64 = sbr.rel (0) target = $region33
    $region32: #{tpu_custom_call.1} parent=1 // pred_region
      _
    $region33: #{tpu_custom_call.1} parent=1 // pred_fallthru
      _
    // Predicated region
    $region34: #{tpu_custom_call.1} parent=1 // pred_check
      _
    $region35: #{tpu_custom_call.1} parent=1 // pred_check_branch
      %66 = sbr.rel (0) target = $region37
    $region36: #{tpu_custom_call.1} parent=1 // pred_region
      %68 = dma.done [#allocation3], 1024
    $region37: #{tpu_custom_call.1} parent=1 // pred_fallthru
      _
    // Predicated region
    $region38: #{tpu_custom_call.1} parent=1 // pred_check
      _
    $region39: #{tpu_custom_call.1} parent=1 // pred_check_branch
      %70 = sbr.rel (0) target = $region41
    $region40: #{tpu_custom_call.1} parent=1 // pred_region
      %72 = dma.done [#allocation6], 1024
    $region41: #{tpu_custom_call.1} parent=1 // pred_fallthru
      _
    // Predicated region
    $region42: #{tpu_custom_call.1} parent=1 // pred_check
      _
    $region43: #{tpu_custom_call.1} parent=1 // pred_check_branch
      %74 = sbr.rel (0) target = $region45
    $region44: #{tpu_custom_call.1} parent=1 // pred_region
      %76 = dma.done [#allocation6], 1024
    $region45: #{tpu_custom_call.1} parent=1 // pred_fallthru
      _
    %v77 = vld [vmem:[#allocation2] sm:$0xff]
    %v78 = vld [vmem:[#allocation2 + $0x8] sm:$0xff]
    %v79 = vld [vmem:[#allocation2 + $0x10] sm:$0xff]
    %v80 = vld [vmem:[#allocation2 + $0x18] sm:$0xff]
    %v81 = vld [vmem:[#allocation2 + $0x20] sm:$0xff]
    %v82 = vld [vmem:[#allocation2 + $0x28] sm:$0xff]
    %v83 = vld [vmem:[#allocation2 + $0x30] sm:$0xff]
    %v84 = vld [vmem:[#allocation2 + $0x38] sm:$0xff]
    %v85 = vld [vmem:[#allocation5] sm:$0xff]
    %v86 = vld [vmem:[#allocation5 + $0x8] sm:$0xff]
    %v87 = vld [vmem:[#allocation5 + $0x10] sm:$0xff]
    %v88 = vld [vmem:[#allocation5 + $0x18] sm:$0xff]
    %v89 = vld [vmem:[#allocation5 + $0x20] sm:$0xff]
    %v90 = vld [vmem:[#allocation5 + $0x28] sm:$0xff]
    %v91 = vld [vmem:[#allocation5 + $0x30] sm:$0xff]
    %v92 = vld [vmem:[#allocation5 + $0x38] sm:$0xff]
    %v93 = vld [vmem:[%s3] sm:$0x1]
    %v95 = vperm.slane %v93, 0
    %vm97 = vcmask 523264
    %v99 = vsel %vm97, %v77, 0
    %v102 = vsel %vm97, %v78, 0
    %v105 = vsel %vm97, %v79, 0
    %v108 = vsel %vm97, %v80, 0
    %v111 = vsel %vm97, %v81, 0
    %v114 = vsel %vm97, %v82, 0
    %v117 = vsel %vm97, %v83, 0
    %v120 = vsel %vm97, %v84, 0
    %122 = vmatpush.msra.mxu0 0.0
    %123 = vmatpush.msra.mxu0 0.0
    %124 = vmatpush.msra.mxu0 0.0
    %125 = vmatpush.msra.mxu0 0.0
    %126 = vmatpush.msra.mxu0 0.0
    %127 = vmatpush.msra.mxu0 0.0
    %128 = vmatpush.msra.mxu0 0.0
    %129 = vmatpush.msra.mxu0 0.0
    %130 = vmatpush.msra.mxu0 %v92
    %131 = vmatpush.msra.mxu0 %v91
    %132 = vmatpush.msra.mxu0 %v90
    %133 = vmatpush.msra.mxu0 %v89
    %134 = vmatpush.msra.mxu0 %v88
    %135 = vmatpush.msra.mxu0 %v87
    %136 = vmatpush.msra.mxu0 %v86
    %137 = vmatpush.msra.mxu0 %v85
    %138 = vmatmul.f32.gmra.mxu0 %v99
    %v139 = vpop.f32.mrf.mxu0
    %v140 = vadd.f32 %v95, %v139
    %141 = vmatmul.f32.gmra.mxu0 %v102
    %v142 = vpop.f32.mrf.mxu0
    %v143 = vadd.f32 %v95, %v142
    %144 = vmatmul.f32.gmra.mxu0 %v105
    %v145 = vpop.f32.mrf.mxu0
    %v146 = vadd.f32 %v95, %v145
    %147 = vmatmul.f32.gmra.mxu0 %v108
    %v148 = vpop.f32.mrf.mxu0
    %v149 = vadd.f32 %v95, %v148
    %150 = vmatmul.f32.gmra.mxu0 %v111
    %v151 = vpop.f32.mrf.mxu0
    %v152 = vadd.f32 %v95, %v151
    %153 = vmatmul.f32.gmra.mxu0 %v114
    %v154 = vpop.f32.mrf.mxu0
    %v155 = vadd.f32 %v95, %v154
    %156 = vmatmul.f32.gmra.mxu0 %v117
    %v157 = vpop.f32.mrf.mxu0
    %v158 = vadd.f32 %v95, %v157
    %159 = vmatmul.f32.gmra.mxu0 %v120
    %v160 = vpop.f32.mrf.mxu0
    %v161 = vadd.f32 %v95, %v160
    %162 = vdwg.mxu0
    %v163 = vld [vmem:[%s2] sm:$0xff]
    %v164 = vld [vmem:[%s2 + $0x8] sm:$0xff]
    %v165 = vld [vmem:[%s2 + $0x10] sm:$0xff]
    %v166 = vld [vmem:[%s2 + $0x18] sm:$0xff]
    %vm167 = vcmask 261120
    %v169 = vsel %vm167, 0.0, 0
    %171 = vmatpush.msra.mxu0 0.0
    %172 = vmatpush.msra.mxu0 0.0
    %173 = vmatpush.msra.mxu0 0.0
    %174 = vmatpush.msra.mxu0 0.0
    %175 = vmatpush.msra.mxu0 0.0
    %176 = vmatpush.msra.mxu0 0.0
    %177 = vmatpush.msra.mxu0 0.0
    %178 = vmatpush.msra.mxu0 0.0
    %179 = vmatpush.msra.mxu0 0.0
    %180 = vmatpush.msra.mxu0 0.0
    %181 = vmatpush.msra.mxu0 0.0
    %182 = vmatpush.msra.mxu0 0.0
    %183 = vmatpush.msra.mxu0 %v166
    %184 = vmatpush.msra.mxu0 %v165
    %185 = vmatpush.msra.mxu0 %v164
    %186 = vmatpush.msra.mxu0 %v163
    %187 = vmatmul.f32.gmra.mxu0 %v169
    %v188 = vpop.f32.mrf.mxu0
    %v189 = vadd.f32 0.0, %v188
    %190 = vdwg.mxu0
    %v191 = vadd.f32 %v140, %v189
    %v192 = vxor.u32 %v191, 2147483648
    %v193 = vmul.f32 %v192, 1.442695
    %v194 = vpow.pop %v193
    %v195 = vadd.f32 %v194, 1.0
    %v196 = vrcp.pop %v195
    %v197 = vmul.f32 %v195, %v196
    %v198 = vsub.f32 1.0, %v197
    %v199 = vmul.f32 %v196, %v198
    %v200 = vadd.f32 %v196, %v199
    %vm201 = vweird.f32 %v195
    %vm202 = vweird.f32 %v196
    %vm203 = vmor %vm201, %vm202
    %v204 = vsel %vm203, %v196, %v200
    %v205 = vand.u32 2147483647, %v195
    %vm206 = vcmp.eq.f32.partialorder %v205, 8.507059e+37
    %v207 = vand.u32 %v195, 2147483648
    %v208 = vor.u32 1.1754944e-38, %v207
    %v209 = vsel %vm206, %v208, %v204
    %v210 = vmul.f32 1.0, %v209
    %v211 = vtanh.pop %v191
    %v212 = vmul.f32 %v210, 0.0
    %214 = vrot.lane.b32.xlu0 %v211, 64
    %v215 = vpop.permute.xlu0 %214
    %v217 = vmul.f32 %v210, %v215
    %219 = vrot.lane.b32.xlu0 %v217, 32
    %v220 = vpop.permute.xlu0 %219
    %v222 = vadd.f32 %v212, %v220
    %v223 = vtanh.pop %v222
    %225 = vrot.lane.b32.xlu0 %v223, 64
    %v226 = vpop.permute.xlu0 %225
    %v228 = vmul.f32 %v210, %v226
    %230 = vrot.lane.b32.xlu0 %v228, 32
    %v231 = vpop.permute.xlu0 %230
    %v233 = vsel %vm167, %v231, 0.0
    %v234 = vld [vmem:[#allocation7] sm:$0xff]
    %v235 = vld [vmem:[#allocation7 + $0x8] sm:$0xff]
    %v236 = vld [vmem:[#allocation7 + $0x10] sm:$0xff]
    %v237 = vld [vmem:[#allocation7 + $0x18] sm:$0xff]
    %v238 = vld [vmem:[#allocation7 + $0x20] sm:$0xff]
    %v239 = vld [vmem:[#allocation7 + $0x28] sm:$0xff]
    %v240 = vld [vmem:[#allocation7 + $0x30] sm:$0xff]
    %v241 = vld [vmem:[#allocation7 + $0x38] sm:$0xff]
    %v242 = vld [vmem:[%s5] sm:$0x1]
    %v244 = vperm.slane %v242, 0
    %v247 = vsel %vm97, %v233, 0
    %249 = vmatpush.msra.mxu0 0.0
    %250 = vmatpush.msra.mxu0 0.0
    %251 = vmatpush.msra.mxu0 0.0
    %252 = vmatpush.msra.mxu0 0.0
    %253 = vmatpush.msra.mxu0 0.0
    %254 = vmatpush.msra.mxu0 0.0
    %255 = vmatpush.msra.mxu0 0.0
    %256 = vmatpush.msra.mxu0 0.0
    %257 = vmatpush.msra.mxu0 %v241
    %258 = vmatpush.msra.mxu0 %v240
    %259 = vmatpush.msra.mxu0 %v239
    %260 = vmatpush.msra.mxu0 %v238
    %261 = vmatpush.msra.mxu0 %v237
    %262 = vmatpush.msra.mxu0 %v236
    %263 = vmatpush.msra.mxu0 %v235
    %264 = vmatpush.msra.mxu0 %v234
    %265 = vmatmul.f32.gmra.mxu0 %v247
    %v266 = vpop.f32.mrf.mxu0
    %v267 = vadd.f32 %v244, %v266
    %268 = vdwg.mxu0
    %v269 = vxor.u32 %v267, 2147483648
    %v270 = vmul.f32 %v269, 1.442695
    %v271 = vpow.pop %v270
    %v272 = vadd.f32 %v271, 1.0
    %v273 = vrcp.pop %v272
    %v274 = vmul.f32 %v272, %v273
    %v275 = vsub.f32 1.0, %v274
    %v276 = vmul.f32 %v273, %v275
    %v277 = vadd.f32 %v273, %v276
    %vm278 = vweird.f32 %v272
    %vm279 = vweird.f32 %v273
    %vm280 = vmor %vm278, %vm279
    %v281 = vsel %vm280, %v273, %v277
    %v282 = vand.u32 2147483647, %v272
    %vm283 = vcmp.eq.f32.partialorder %v282, 8.507059e+37
    %v284 = vand.u32 %v272, 2147483648
    %v285 = vor.u32 1.1754944e-38, %v284
    %v286 = vsel %vm283, %v285, %v281
    %v287 = vmul.f32 1.0, %v286
    %v288 = vtanh.pop %v267
    %v289 = vmul.f32 %v287, 0.0
    %291 = vrot.lane.b32.xlu0 %v288, 64
    %v292 = vpop.permute.xlu0 %291
    %v294 = vmul.f32 %v287, %v292
    %296 = vrot.lane.b32.xlu0 %v294, 32
    %v297 = vpop.permute.xlu0 %296
    %v299 = vadd.f32 %v289, %v297
    %v300 = vtanh.pop %v299
    %302 = vrot.lane.b32.xlu0 %v300, 64
    %v303 = vpop.permute.xlu0 %302
    %v305 = vmul.f32 %v287, %v303
    %v306 = vsel %vm167, %v231, 0
    %308 = vmatpush.msra.mxu0 0.0
    %309 = vmatpush.msra.mxu0 0.0
    %310 = vmatpush.msra.mxu0 0.0
    %311 = vmatpush.msra.mxu0 0.0
    %312 = vmatpush.msra.mxu0 0.0
    %313 = vmatpush.msra.mxu0 0.0
    %314 = vmatpush.msra.mxu0 0.0
    %315 = vmatpush.msra.mxu0 0.0
    %316 = vmatpush.msra.mxu0 0.0
    %317 = vmatpush.msra.mxu0 0.0
    %318 = vmatpush.msra.mxu0 0.0
    %319 = vmatpush.msra.mxu0 0.0
    %320 = vmatpush.msra.mxu0 %v166
    %321 = vmatpush.msra.mxu0 %v165
    %322 = vmatpush.msra.mxu0 %v164
    %323 = vmatpush.msra.mxu0 %v163
    %324 = vmatmul.f32.gmra.mxu0 %v306
    %v325 = vpop.f32.mrf.mxu0
    %v326 = vadd.f32 0.0, %v325
    %327 = vdwg.mxu0
    %v328 = vadd.f32 %v143, %v326
    %v329 = vxor.u32 %v328, 2147483648
    %v330 = vmul.f32 %v329, 1.442695
    %v331 = vpow.pop %v330
    %v332 = vadd.f32 %v331, 1.0
    %v333 = vrcp.pop %v332
    %v334 = vmul.f32 %v332, %v333
    %v335 = vsub.f32 1.0, %v334
    %v336 = vmul.f32 %v333, %v335
    %v337 = vadd.f32 %v333, %v336
    %vm338 = vweird.f32 %v332
    %vm339 = vweird.f32 %v333
    %vm340 = vmor %vm338, %vm339
    %v341 = vsel %vm340, %v333, %v337
    %v342 = vand.u32 2147483647, %v332
    %vm343 = vcmp.eq.f32.partialorder %v342, 8.507059e+37
    %v344 = vand.u32 %v332, 2147483648
    %v345 = vor.u32 1.1754944e-38, %v344
    %v346 = vsel %vm343, %v345, %v341
    %v347 = vmul.f32 1.0, %v346
    %v348 = vtanh.pop %v328
    %v349 = vmul.f32 %v347, %v222
    %351 = vrot.lane.b32.xlu0 %v348, 64
    %v352 = vpop.permute.xlu0 %351
    %v354 = vmul.f32 %v347, %v352
    %356 = vrot.lane.b32.xlu0 %v354, 32
    %v357 = vpop.permute.xlu0 %356
    %v359 = vadd.f32 %v349, %v357
    %v360 = vtanh.pop %v359
    %362 = vrot.lane.b32.xlu0 %v360, 64
    %v363 = vpop.permute.xlu0 %362
    %v365 = vmul.f32 %v347, %v363
    %367 = vrot.lane.b32.xlu0 %v365, 32
    %v368 = vpop.permute.xlu0 %367
    %371 = vrot.lane.b32.xlu0 %v305, 64
    %v372 = vpop.permute.xlu0 %371
    %v374 = vsel %vm167, %v368, %v372
    %v376 = vsel %vm97, %v374, 0
    %378 = vmatpush.msra.mxu0 0.0
    %379 = vmatpush.msra.mxu0 0.0
    %380 = vmatpush.msra.mxu0 0.0
    %381 = vmatpush.msra.mxu0 0.0
    %382 = vmatpush.msra.mxu0 0.0
    %383 = vmatpush.msra.mxu0 0.0
    %384 = vmatpush.msra.mxu0 0.0
    %385 = vmatpush.msra.mxu0 0.0
    %386 = vmatpush.msra.mxu0 %v241
    %387 = vmatpush.msra.mxu0 %v240
    %388 = vmatpush.msra.mxu0 %v239
    %389 = vmatpush.msra.mxu0 %v238
    %390 = vmatpush.msra.mxu0 %v237
    %391 = vmatpush.msra.mxu0 %v236
    %392 = vmatpush.msra.mxu0 %v235
    %393 = vmatpush.msra.mxu0 %v234
    %394 = vmatmul.f32.gmra.mxu0 %v376
    %v395 = vpop.f32.mrf.mxu0
    %v396 = vadd.f32 %v244, %v395
    %397 = vdwg.mxu0
    %v398 = vxor.u32 %v396, 2147483648
    %v399 = vmul.f32 %v398, 1.442695
    %v400 = vpow.pop %v399
    %v401 = vadd.f32 %v400, 1.0
    %v402 = vrcp.pop %v401
    %v403 = vmul.f32 %v401, %v402
    %v404 = vsub.f32 1.0, %v403
    %v405 = vmul.f32 %v402, %v404
    %v406 = vadd.f32 %v402, %v405
    %vm407 = vweird.f32 %v401
    %vm408 = vweird.f32 %v402
    %vm409 = vmor %vm407, %vm408
    %v410 = vsel %vm409, %v402, %v406
    %v411 = vand.u32 2147483647, %v401
    %vm412 = vcmp.eq.f32.partialorder %v411, 8.507059e+37
    %v413 = vand.u32 %v401, 2147483648
    %v414 = vor.u32 1.1754944e-38, %v413
    %v415 = vsel %vm412, %v414, %v410
    %v416 = vmul.f32 1.0, %v415
    %v417 = vtanh.pop %v396
    %v418 = vmul.f32 %v416, %v299
    %420 = vrot.lane.b32.xlu0 %v417, 64
    %v421 = vpop.permute.xlu0 %420
    %v423 = vmul.f32 %v416, %v421
    %425 = vrot.lane.b32.xlu0 %v423, 32
    %v426 = vpop.permute.xlu0 %425
    %v428 = vadd.f32 %v418, %v426
    %v429 = vtanh.pop %v428
    %431 = vrot.lane.b32.xlu0 %v429, 64
    %v432 = vpop.permute.xlu0 %431
    %v434 = vmul.f32 %v416, %v432
    %v435 = vsel %vm167, %v368, 0
    %437 = vmatpush.msra.mxu0 0.0
    %438 = vmatpush.msra.mxu0 0.0
    %439 = vmatpush.msra.mxu0 0.0
    %440 = vmatpush.msra.mxu0 0.0
    %441 = vmatpush.msra.mxu0 0.0
    %442 = vmatpush.msra.mxu0 0.0
    %443 = vmatpush.msra.mxu0 0.0
    %444 = vmatpush.msra.mxu0 0.0
    %445 = vmatpush.msra.mxu0 0.0
    %446 = vmatpush.msra.mxu0 0.0
    %447 = vmatpush.msra.mxu0 0.0
    %448 = vmatpush.msra.mxu0 0.0
    %449 = vmatpush.msra.mxu0 %v166
    %450 = vmatpush.msra.mxu0 %v165
    %451 = vmatpush.msra.mxu0 %v164
    %452 = vmatpush.msra.mxu0 %v163
    %453 = vmatmul.f32.gmra.mxu0 %v435
    %v454 = vpop.f32.mrf.mxu0
    %v455 = vadd.f32 0.0, %v454
    %456 = vdwg.mxu0
    %v457 = vadd.f32 %v146, %v455
    %v458 = vxor.u32 %v457, 2147483648
    %v459 = vmul.f32 %v458, 1.442695
    %v460 = vpow.pop %v459
    %v461 = vadd.f32 %v460, 1.0
    %v462 = vrcp.pop %v461
    %v463 = vmul.f32 %v461, %v462
    %v464 = vsub.f32 1.0, %v463
    %v465 = vmul.f32 %v462, %v464
    %v466 = vadd.f32 %v462, %v465
    %vm467 = vweird.f32 %v461
    %vm468 = vweird.f32 %v462
    %vm469 = vmor %vm467, %vm468
    %v470 = vsel %vm469, %v462, %v466
    %v471 = vand.u32 2147483647, %v461
    %vm472 = vcmp.eq.f32.partialorder %v471, 8.507059e+37
    %v473 = vand.u32 %v461, 2147483648
    %v474 = vor.u32 1.1754944e-38, %v473
    %v475 = vsel %vm472, %v474, %v470
    %v476 = vmul.f32 1.0, %v475
    %v477 = vtanh.pop %v457
    %v478 = vmul.f32 %v476, %v359
    %480 = vrot.lane.b32.xlu0 %v477, 64
    %v481 = vpop.permute.xlu0 %480
    %v483 = vmul.f32 %v476, %v481
    %485 = vrot.lane.b32.xlu0 %v483, 32
    %v486 = vpop.permute.xlu0 %485
    %v488 = vadd.f32 %v478, %v486
    %v489 = vtanh.pop %v488
    %491 = vrot.lane.b32.xlu0 %v489, 64
    %v492 = vpop.permute.xlu0 %491
    %v494 = vmul.f32 %v476, %v492
    %496 = vrot.lane.b32.xlu0 %v494, 32
    %v497 = vpop.permute.xlu0 %496
    %500 = vrot.lane.b32.xlu0 %v434, 64
    %v501 = vpop.permute.xlu0 %500
    %v503 = vsel %vm167, %v497, %v501
    %v505 = vsel %vm97, %v503, 0
    %507 = vmatpush.msra.mxu0 0.0
    %508 = vmatpush.msra.mxu0 0.0
    %509 = vmatpush.msra.mxu0 0.0
    %510 = vmatpush.msra.mxu0 0.0
    %511 = vmatpush.msra.mxu0 0.0
    %512 = vmatpush.msra.mxu0 0.0
    %513 = vmatpush.msra.mxu0 0.0
    %514 = vmatpush.msra.mxu0 0.0
    %515 = vmatpush.msra.mxu0 %v241
    %516 = vmatpush.msra.mxu0 %v240
    %517 = vmatpush.msra.mxu0 %v239
    %518 = vmatpush.msra.mxu0 %v238
    %519 = vmatpush.msra.mxu0 %v237
    %520 = vmatpush.msra.mxu0 %v236
    %521 = vmatpush.msra.mxu0 %v235
    %522 = vmatpush.msra.mxu0 %v234
    %523 = vmatmul.f32.gmra.mxu0 %v505
    %v524 = vpop.f32.mrf.mxu0
    %v525 = vadd.f32 %v244, %v524
    %526 = vdwg.mxu0
    %v527 = vxor.u32 %v525, 2147483648
    %v528 = vmul.f32 %v527, 1.442695
    %v529 = vpow.pop %v528
    %v530 = vadd.f32 %v529, 1.0
    %v531 = vrcp.pop %v530
    %v532 = vmul.f32 %v530, %v531
    %v533 = vsub.f32 1.0, %v532
    %v534 = vmul.f32 %v531, %v533
    %v535 = vadd.f32 %v531, %v534
    %vm536 = vweird.f32 %v530
    %vm537 = vweird.f32 %v531
    %vm538 = vmor %vm536, %vm537
    %v539 = vsel %vm538, %v531, %v535
    %v540 = vand.u32 2147483647, %v530
    %vm541 = vcmp.eq.f32.partialorder %v540, 8.507059e+37
    %v542 = vand.u32 %v530, 2147483648
    %v543 = vor.u32 1.1754944e-38, %v542
    %v544 = vsel %vm541, %v543, %v539
    %v545 = vmul.f32 1.0, %v544
    %v546 = vtanh.pop %v525
    %v547 = vmul.f32 %v545, %v428
    %549 = vrot.lane.b32.xlu0 %v546, 64
    %v550 = vpop.permute.xlu0 %549
    %v552 = vmul.f32 %v545, %v550
    %554 = vrot.lane.b32.xlu0 %v552, 32
    %v555 = vpop.permute.xlu0 %554
    %v557 = vadd.f32 %v547, %v555
    %v558 = vtanh.pop %v557
    %560 = vrot.lane.b32.xlu0 %v558, 64
    %v561 = vpop.permute.xlu0 %560
    %v563 = vmul.f32 %v545, %v561
    %v564 = vsel %vm167, %v497, 0
    %566 = vmatpush.msra.mxu0 0.0
    %567 = vmatpush.msra.mxu0 0.0
    %568 = vmatpush.msra.mxu0 0.0
    %569 = vmatpush.msra.mxu0 0.0
    %570 = vmatpush.msra.mxu0 0.0
    %571 = vmatpush.msra.mxu0 0.0
    %572 = vmatpush.msra.mxu0 0.0
    %573 = vmatpush.msra.mxu0 0.0
    %574 = vmatpush.msra.mxu0 0.0
    %575 = vmatpush.msra.mxu0 0.0
    %576 = vmatpush.msra.mxu0 0.0
    %577 = vmatpush.msra.mxu0 0.0
    %578 = vmatpush.msra.mxu0 %v166
    %579 = vmatpush.msra.mxu0 %v165
    %580 = vmatpush.msra.mxu0 %v164
    %581 = vmatpush.msra.mxu0 %v163
    %582 = vmatmul.f32.gmra.mxu0 %v564
    %v583 = vpop.f32.mrf.mxu0
    %v584 = vadd.f32 0.0, %v583
    %585 = vdwg.mxu0
    %v586 = vadd.f32 %v149, %v584
    %v587 = vxor.u32 %v586, 2147483648
    %v588 = vmul.f32 %v587, 1.442695
    %v589 = vpow.pop %v588
    %v590 = vadd.f32 %v589, 1.0
    %v591 = vrcp.pop %v590
    %v592 = vmul.f32 %v590, %v591
    %v593 = vsub.f32 1.0, %v592
    %v594 = vmul.f32 %v591, %v593
    %v595 = vadd.f32 %v591, %v594
    %vm596 = vweird.f32 %v590
    %vm597 = vweird.f32 %v591
    %vm598 = vmor %vm596, %vm597
    %v599 = vsel %vm598, %v591, %v595
    %v600 = vand.u32 2147483647, %v590
    %vm601 = vcmp.eq.f32.partialorder %v600, 8.507059e+37
    %v602 = vand.u32 %v590, 2147483648
    %v603 = vor.u32 1.1754944e-38, %v602
    %v604 = vsel %vm601, %v603, %v599
    %v605 = vmul.f32 1.0, %v604
    %v606 = vtanh.pop %v586
    %v607 = vmul.f32 %v605, %v488
    %609 = vrot.lane.b32.xlu0 %v606, 64
    %v610 = vpop.permute.xlu0 %609
    %v612 = vmul.f32 %v605, %v610
    %614 = vrot.lane.b32.xlu0 %v612, 32
    %v615 = vpop.permute.xlu0 %614
    %v617 = vadd.f32 %v607, %v615
    %v618 = vtanh.pop %v617
    %620 = vrot.lane.b32.xlu0 %v618, 64
    %v621 = vpop.permute.xlu0 %620
    %v623 = vmul.f32 %v605, %v621
    %625 = vrot.lane.b32.xlu0 %v623, 32
    %v626 = vpop.permute.xlu0 %625
    %629 = vrot.lane.b32.xlu0 %v563, 64
    %v630 = vpop.permute.xlu0 %629
    %v632 = vsel %vm167, %v626, %v630
    %v634 = vsel %vm97, %v632, 0
    %636 = vmatpush.msra.mxu0 0.0
    %637 = vmatpush.msra.mxu0 0.0
    %638 = vmatpush.msra.mxu0 0.0
    %639 = vmatpush.msra.mxu0 0.0
    %640 = vmatpush.msra.mxu0 0.0
    %641 = vmatpush.msra.mxu0 0.0
    %642 = vmatpush.msra.mxu0 0.0
    %643 = vmatpush.msra.mxu0 0.0
    %644 = vmatpush.msra.mxu0 %v241
    %645 = vmatpush.msra.mxu0 %v240
    %646 = vmatpush.msra.mxu0 %v239
    %647 = vmatpush.msra.mxu0 %v238
    %648 = vmatpush.msra.mxu0 %v237
    %649 = vmatpush.msra.mxu0 %v236
    %650 = vmatpush.msra.mxu0 %v235
    %651 = vmatpush.msra.mxu0 %v234
    %652 = vmatmul.f32.gmra.mxu0 %v634
    %v653 = vpop.f32.mrf.mxu0
    %v654 = vadd.f32 %v244, %v653
    %655 = vdwg.mxu0
    %v656 = vxor.u32 %v654, 2147483648
    %v657 = vmul.f32 %v656, 1.442695
    %v658 = vpow.pop %v657
    %v659 = vadd.f32 %v658, 1.0
    %v660 = vrcp.pop %v659
    %v661 = vmul.f32 %v659, %v660
    %v662 = vsub.f32 1.0, %v661
    %v663 = vmul.f32 %v660, %v662
    %v664 = vadd.f32 %v660, %v663
    %vm665 = vweird.f32 %v659
    %vm666 = vweird.f32 %v660
    %vm667 = vmor %vm665, %vm666
    %v668 = vsel %vm667, %v660, %v664
    %v669 = vand.u32 2147483647, %v659
    %vm670 = vcmp.eq.f32.partialorder %v669, 8.507059e+37
    %v671 = vand.u32 %v659, 2147483648
    %v672 = vor.u32 1.1754944e-38, %v671
    %v673 = vsel %vm670, %v672, %v668
    %v674 = vmul.f32 1.0, %v673
    %v675 = vtanh.pop %v654
    %v676 = vmul.f32 %v674, %v557
    %678 = vrot.lane.b32.xlu0 %v675, 64
    %v679 = vpop.permute.xlu0 %678
    %v681 = vmul.f32 %v674, %v679
    %683 = vrot.lane.b32.xlu0 %v681, 32
    %v684 = vpop.permute.xlu0 %683
    %v686 = vadd.f32 %v676, %v684
    %v687 = vtanh.pop %v686
    %689 = vrot.lane.b32.xlu0 %v687, 64
    %v690 = vpop.permute.xlu0 %689
    %v692 = vmul.f32 %v674, %v690
    %v693 = vsel %vm167, %v626, 0
    %695 = vmatpush.msra.mxu0 0.0
    %696 = vmatpush.msra.mxu0 0.0
    %697 = vmatpush.msra.mxu0 0.0
    %698 = vmatpush.msra.mxu0 0.0
    %699 = vmatpush.msra.mxu0 0.0
    %700 = vmatpush.msra.mxu0 0.0
    %701 = vmatpush.msra.mxu0 0.0
    %702 = vmatpush.msra.mxu0 0.0
    %703 = vmatpush.msra.mxu0 0.0
    %704 = vmatpush.msra.mxu0 0.0
    %705 = vmatpush.msra.mxu0 0.0
    %706 = vmatpush.msra.mxu0 0.0
    %707 = vmatpush.msra.mxu0 %v166
    %708 = vmatpush.msra.mxu0 %v165
    %709 = vmatpush.msra.mxu0 %v164
    %710 = vmatpush.msra.mxu0 %v163
    %711 = vmatmul.f32.gmra.mxu0 %v693
    %v712 = vpop.f32.mrf.mxu0
    %v713 = vadd.f32 0.0, %v712
    %714 = vdwg.mxu0
    %v715 = vadd.f32 %v152, %v713
    %v716 = vxor.u32 %v715, 2147483648
    %v717 = vmul.f32 %v716, 1.442695
    %v718 = vpow.pop %v717
    %v719 = vadd.f32 %v718, 1.0
    %v720 = vrcp.pop %v719
    %v721 = vmul.f32 %v719, %v720
    %v722 = vsub.f32 1.0, %v721
    %v723 = vmul.f32 %v720, %v722
    %v724 = vadd.f32 %v720, %v723
    %vm725 = vweird.f32 %v719
    %vm726 = vweird.f32 %v720
    %vm727 = vmor %vm725, %vm726
    %v728 = vsel %vm727, %v720, %v724
    %v729 = vand.u32 2147483647, %v719
    %vm730 = vcmp.eq.f32.partialorder %v729, 8.507059e+37
    %v731 = vand.u32 %v719, 2147483648
    %v732 = vor.u32 1.1754944e-38, %v731
    %v733 = vsel %vm730, %v732, %v728
    %v734 = vmul.f32 1.0, %v733
    %v735 = vtanh.pop %v715
    %v736 = vmul.f32 %v734, %v617
    %738 = vrot.lane.b32.xlu0 %v735, 64
    %v739 = vpop.permute.xlu0 %738
    %v741 = vmul.f32 %v734, %v739
    %743 = vrot.lane.b32.xlu0 %v741, 32
    %v744 = vpop.permute.xlu0 %743
    %v746 = vadd.f32 %v736, %v744
    %v747 = vtanh.pop %v746
    %749 = vrot.lane.b32.xlu0 %v747, 64
    %v750 = vpop.permute.xlu0 %749
    %v752 = vmul.f32 %v734, %v750
    %754 = vrot.lane.b32.xlu0 %v752, 32
    %v755 = vpop.permute.xlu0 %754
    %758 = vrot.lane.b32.xlu0 %v692, 64
    %v759 = vpop.permute.xlu0 %758
    %v761 = vsel %vm167, %v755, %v759
    %v763 = vsel %vm97, %v761, 0
    %765 = vmatpush.msra.mxu0 0.0
    %766 = vmatpush.msra.mxu0 0.0
    %767 = vmatpush.msra.mxu0 0.0
    %768 = vmatpush.msra.mxu0 0.0
    %769 = vmatpush.msra.mxu0 0.0
    %770 = vmatpush.msra.mxu0 0.0
    %771 = vmatpush.msra.mxu0 0.0
    %772 = vmatpush.msra.mxu0 0.0
    %773 = vmatpush.msra.mxu0 %v241
    %774 = vmatpush.msra.mxu0 %v240
    %775 = vmatpush.msra.mxu0 %v239
    %776 = vmatpush.msra.mxu0 %v238
    %777 = vmatpush.msra.mxu0 %v237
    %778 = vmatpush.msra.mxu0 %v236
    %779 = vmatpush.msra.mxu0 %v235
    %780 = vmatpush.msra.mxu0 %v234
    %781 = vmatmul.f32.gmra.mxu0 %v763
    %v782 = vpop.f32.mrf.mxu0
    %v783 = vadd.f32 %v244, %v782
    %784 = vdwg.mxu0
    %v785 = vxor.u32 %v783, 2147483648
    %v786 = vmul.f32 %v785, 1.442695
    %v787 = vpow.pop %v786
    %v788 = vadd.f32 %v787, 1.0
    %v789 = vrcp.pop %v788
    %v790 = vmul.f32 %v788, %v789
    %v791 = vsub.f32 1.0, %v790
    %v792 = vmul.f32 %v789, %v791
    %v793 = vadd.f32 %v789, %v792
    %vm794 = vweird.f32 %v788
    %vm795 = vweird.f32 %v789
    %vm796 = vmor %vm794, %vm795
    %v797 = vsel %vm796, %v789, %v793
    %v798 = vand.u32 2147483647, %v788
    %vm799 = vcmp.eq.f32.partialorder %v798, 8.507059e+37
    %v800 = vand.u32 %v788, 2147483648
    %v801 = vor.u32 1.1754944e-38, %v800
    %v802 = vsel %vm799, %v801, %v797
    %v803 = vmul.f32 1.0, %v802
    %v804 = vtanh.pop %v783
    %v805 = vmul.f32 %v803, %v686
    %807 = vrot.lane.b32.xlu0 %v804, 64
    %v808 = vpop.permute.xlu0 %807
    %v810 = vmul.f32 %v803, %v808
    %812 = vrot.lane.b32.xlu0 %v810, 32
    %v813 = vpop.permute.xlu0 %812
    %v815 = vadd.f32 %v805, %v813
    %v816 = vtanh.pop %v815
    %818 = vrot.lane.b32.xlu0 %v816, 64
    %v819 = vpop.permute.xlu0 %818
    %v821 = vmul.f32 %v803, %v819
    %v822 = vsel %vm167, %v755, 0
    %824 = vmatpush.msra.mxu0 0.0
    %825 = vmatpush.msra.mxu0 0.0
    %826 = vmatpush.msra.mxu0 0.0
    %827 = vmatpush.msra.mxu0 0.0
    %828 = vmatpush.msra.mxu0 0.0
    %829 = vmatpush.msra.mxu0 0.0
    %830 = vmatpush.msra.mxu0 0.0
    %831 = vmatpush.msra.mxu0 0.0
    %832 = vmatpush.msra.mxu0 0.0
    %833 = vmatpush.msra.mxu0 0.0
    %834 = vmatpush.msra.mxu0 0.0
    %835 = vmatpush.msra.mxu0 0.0
    %836 = vmatpush.msra.mxu0 %v166
    %837 = vmatpush.msra.mxu0 %v165
    %838 = vmatpush.msra.mxu0 %v164
    %839 = vmatpush.msra.mxu0 %v163
    %840 = vmatmul.f32.gmra.mxu0 %v822
    %v841 = vpop.f32.mrf.mxu0
    %v842 = vadd.f32 0.0, %v841
    %843 = vdwg.mxu0
    %v844 = vadd.f32 %v155, %v842
    %v845 = vxor.u32 %v844, 2147483648
    %v846 = vmul.f32 %v845, 1.442695
    %v847 = vpow.pop %v846
    %v848 = vadd.f32 %v847, 1.0
    %v849 = vrcp.pop %v848
    %v850 = vmul.f32 %v848, %v849
    %v851 = vsub.f32 1.0, %v850
    %v852 = vmul.f32 %v849, %v851
    %v853 = vadd.f32 %v849, %v852
    %vm854 = vweird.f32 %v848
    %vm855 = vweird.f32 %v849
    %vm856 = vmor %vm854, %vm855
    %v857 = vsel %vm856, %v849, %v853
    %v858 = vand.u32 2147483647, %v848
    %vm859 = vcmp.eq.f32.partialorder %v858, 8.507059e+37
    %v860 = vand.u32 %v848, 2147483648
    %v861 = vor.u32 1.1754944e-38, %v860
    %v862 = vsel %vm859, %v861, %v857
    %v863 = vmul.f32 1.0, %v862
    %v864 = vtanh.pop %v844
    %v865 = vmul.f32 %v863, %v746
    %867 = vrot.lane.b32.xlu0 %v864, 64
    %v868 = vpop.permute.xlu0 %867
    %v870 = vmul.f32 %v863, %v868
    %872 = vrot.lane.b32.xlu0 %v870, 32
    %v873 = vpop.permute.xlu0 %872
    %v875 = vadd.f32 %v865, %v873
    %v876 = vtanh.pop %v875
    %878 = vrot.lane.b32.xlu0 %v876, 64
    %v879 = vpop.permute.xlu0 %878
    %v881 = vmul.f32 %v863, %v879
    %883 = vrot.lane.b32.xlu0 %v881, 32
    %v884 = vpop.permute.xlu0 %883
    %887 = vrot.lane.b32.xlu0 %v821, 64
    %v888 = vpop.permute.xlu0 %887
    %v890 = vsel %vm167, %v884, %v888
    %v892 = vsel %vm97, %v890, 0
    %894 = vmatpush.msra.mxu0 0.0
    %895 = vmatpush.msra.mxu0 0.0
    %896 = vmatpush.msra.mxu0 0.0
    %897 = vmatpush.msra.mxu0 0.0
    %898 = vmatpush.msra.mxu0 0.0
    %899 = vmatpush.msra.mxu0 0.0
    %900 = vmatpush.msra.mxu0 0.0
    %901 = vmatpush.msra.mxu0 0.0
    %902 = vmatpush.msra.mxu0 %v241
    %903 = vmatpush.msra.mxu0 %v240
    %904 = vmatpush.msra.mxu0 %v239
    %905 = vmatpush.msra.mxu0 %v238
    %906 = vmatpush.msra.mxu0 %v237
    %907 = vmatpush.msra.mxu0 %v236
    %908 = vmatpush.msra.mxu0 %v235
    %909 = vmatpush.msra.mxu0 %v234
    %910 = vmatmul.f32.gmra.mxu0 %v892
    %v911 = vpop.f32.mrf.mxu0
    %v912 = vadd.f32 %v244, %v911
    %913 = vdwg.mxu0
    %v914 = vxor.u32 %v912, 2147483648
    %v915 = vmul.f32 %v914, 1.442695
    %v916 = vpow.pop %v915
    %v917 = vadd.f32 %v916, 1.0
    %v918 = vrcp.pop %v917
    %v919 = vmul.f32 %v917, %v918
    %v920 = vsub.f32 1.0, %v919
    %v921 = vmul.f32 %v918, %v920
    %v922 = vadd.f32 %v918, %v921
    %vm923 = vweird.f32 %v917
    %vm924 = vweird.f32 %v918
    %vm925 = vmor %vm923, %vm924
    %v926 = vsel %vm925, %v918, %v922
    %v927 = vand.u32 2147483647, %v917
    %vm928 = vcmp.eq.f32.partialorder %v927, 8.507059e+37
    %v929 = vand.u32 %v917, 2147483648
    %v930 = vor.u32 1.1754944e-38, %v929
    %v931 = vsel %vm928, %v930, %v926
    %v932 = vmul.f32 1.0, %v931
    %v933 = vtanh.pop %v912
    %v934 = vmul.f32 %v932, %v815
    %936 = vrot.lane.b32.xlu0 %v933, 64
    %v937 = vpop.permute.xlu0 %936
    %v939 = vmul.f32 %v932, %v937
    %941 = vrot.lane.b32.xlu0 %v939, 32
    %v942 = vpop.permute.xlu0 %941
    %v944 = vadd.f32 %v934, %v942
    %v945 = vtanh.pop %v944
    %947 = vrot.lane.b32.xlu0 %v945, 64
    %v948 = vpop.permute.xlu0 %947
    %v950 = vmul.f32 %v932, %v948
    %v951 = vsel %vm167, %v884, 0
    %953 = vmatpush.msra.mxu0 0.0
    %954 = vmatpush.msra.mxu0 0.0
    %955 = vmatpush.msra.mxu0 0.0
    %956 = vmatpush.msra.mxu0 0.0
    %957 = vmatpush.msra.mxu0 0.0
    %958 = vmatpush.msra.mxu0 0.0
    %959 = vmatpush.msra.mxu0 0.0
    %960 = vmatpush.msra.mxu0 0.0
    %961 = vmatpush.msra.mxu0 0.0
    %962 = vmatpush.msra.mxu0 0.0
    %963 = vmatpush.msra.mxu0 0.0
    %964 = vmatpush.msra.mxu0 0.0
    %965 = vmatpush.msra.mxu0 %v166
    %966 = vmatpush.msra.mxu0 %v165
    %967 = vmatpush.msra.mxu0 %v164
    %968 = vmatpush.msra.mxu0 %v163
    %969 = vmatmul.f32.gmra.mxu0 %v951
    %v970 = vpop.f32.mrf.mxu0
    %v971 = vadd.f32 0.0, %v970
    %972 = vdwg.mxu0
    %v973 = vadd.f32 %v158, %v971
    %v974 = vxor.u32 %v973, 2147483648
    %v975 = vmul.f32 %v974, 1.442695
    %v976 = vpow.pop %v975
    %v977 = vadd.f32 %v976, 1.0
    %v978 = vrcp.pop %v977
    %v979 = vmul.f32 %v977, %v978
    %v980 = vsub.f32 1.0, %v979
    %v981 = vmul.f32 %v978, %v980
    %v982 = vadd.f32 %v978, %v981
    %vm983 = vweird.f32 %v977
    %vm984 = vweird.f32 %v978
    %vm985 = vmor %vm983, %vm984
    %v986 = vsel %vm985, %v978, %v982
    %v987 = vand.u32 2147483647, %v977
    %vm988 = vcmp.eq.f32.partialorder %v987, 8.507059e+37
    %v989 = vand.u32 %v977, 2147483648
    %v990 = vor.u32 1.1754944e-38, %v989
    %v991 = vsel %vm988, %v990, %v986
    %v992 = vmul.f32 1.0, %v991
    %v993 = vtanh.pop %v973
    %v994 = vmul.f32 %v992, %v875
    %996 = vrot.lane.b32.xlu0 %v993, 64
    %v997 = vpop.permute.xlu0 %996
    %v999 = vmul.f32 %v992, %v997
    %1001 = vrot.lane.b32.xlu0 %v999, 32
    %v1002 = vpop.permute.xlu0 %1001
    %v1004 = vadd.f32 %v994, %v1002
    %v1005 = vtanh.pop %v1004
    %1007 = vrot.lane.b32.xlu0 %v1005, 64
    %v1008 = vpop.permute.xlu0 %1007
    %v1010 = vmul.f32 %v992, %v1008
    %1012 = vrot.lane.b32.xlu0 %v1010, 32
    %v1013 = vpop.permute.xlu0 %1012
    %1016 = vrot.lane.b32.xlu0 %v950, 64
    %v1017 = vpop.permute.xlu0 %1016
    %v1019 = vsel %vm167, %v1013, %v1017
    %v1021 = vsel %vm97, %v1019, 0
    %1023 = vmatpush.msra.mxu0 0.0
    %1024 = vmatpush.msra.mxu0 0.0
    %1025 = vmatpush.msra.mxu0 0.0
    %1026 = vmatpush.msra.mxu0 0.0
    %1027 = vmatpush.msra.mxu0 0.0
    %1028 = vmatpush.msra.mxu0 0.0
    %1029 = vmatpush.msra.mxu0 0.0
    %1030 = vmatpush.msra.mxu0 0.0
    %1031 = vmatpush.msra.mxu0 %v241
    %1032 = vmatpush.msra.mxu0 %v240
    %1033 = vmatpush.msra.mxu0 %v239
    %1034 = vmatpush.msra.mxu0 %v238
    %1035 = vmatpush.msra.mxu0 %v237
    %1036 = vmatpush.msra.mxu0 %v236
    %1037 = vmatpush.msra.mxu0 %v235
    %1038 = vmatpush.msra.mxu0 %v234
    %1039 = vmatmul.f32.gmra.mxu0 %v1021
    %v1040 = vpop.f32.mrf.mxu0
    %v1041 = vadd.f32 %v244, %v1040
    %1042 = vdwg.mxu0
    %v1043 = vxor.u32 %v1041, 2147483648
    %v1044 = vmul.f32 %v1043, 1.442695
    %v1045 = vpow.pop %v1044
    %v1046 = vadd.f32 %v1045, 1.0
    %v1047 = vrcp.pop %v1046
    %v1048 = vmul.f32 %v1046, %v1047
    %v1049 = vsub.f32 1.0, %v1048
    %v1050 = vmul.f32 %v1047, %v1049
    %v1051 = vadd.f32 %v1047, %v1050
    %vm1052 = vweird.f32 %v1046
    %vm1053 = vweird.f32 %v1047
    %vm1054 = vmor %vm1052, %vm1053
    %v1055 = vsel %vm1054, %v1047, %v1051
    %v1056 = vand.u32 2147483647, %v1046
    %vm1057 = vcmp.eq.f32.partialorder %v1056, 8.507059e+37
    %v1058 = vand.u32 %v1046, 2147483648
    %v1059 = vor.u32 1.1754944e-38, %v1058
    %v1060 = vsel %vm1057, %v1059, %v1055
    %v1061 = vmul.f32 1.0, %v1060
    %v1062 = vtanh.pop %v1041
    %v1063 = vmul.f32 %v1061, %v944
    %1065 = vrot.lane.b32.xlu0 %v1062, 64
    %v1066 = vpop.permute.xlu0 %1065
    %v1068 = vmul.f32 %v1061, %v1066
    %1070 = vrot.lane.b32.xlu0 %v1068, 32
    %v1071 = vpop.permute.xlu0 %1070
    %v1073 = vadd.f32 %v1063, %v1071
    %v1074 = vtanh.pop %v1073
    %1076 = vrot.lane.b32.xlu0 %v1074, 64
    %v1077 = vpop.permute.xlu0 %1076
    %v1079 = vmul.f32 %v1061, %v1077
    %v1080 = vsel %vm167, %v1013, 0
    %1082 = vmatpush.msra.mxu0 0.0
    %1083 = vmatpush.msra.mxu0 0.0
    %1084 = vmatpush.msra.mxu0 0.0
    %1085 = vmatpush.msra.mxu0 0.0
    %1086 = vmatpush.msra.mxu0 0.0
    %1087 = vmatpush.msra.mxu0 0.0
    %1088 = vmatpush.msra.mxu0 0.0
    %1089 = vmatpush.msra.mxu0 0.0
    %1090 = vmatpush.msra.mxu0 0.0
    %1091 = vmatpush.msra.mxu0 0.0
    %1092 = vmatpush.msra.mxu0 0.0
    %1093 = vmatpush.msra.mxu0 0.0
    %1094 = vmatpush.msra.mxu0 %v166
    %1095 = vmatpush.msra.mxu0 %v165
    %1096 = vmatpush.msra.mxu0 %v164
    %1097 = vmatpush.msra.mxu0 %v163
    %1098 = vmatmul.f32.gmra.mxu0 %v1080
    %v1099 = vpop.f32.mrf.mxu0
    %v1100 = vadd.f32 0.0, %v1099
    %1101 = vdwg.mxu0
    %v1102 = vadd.f32 %v161, %v1100
    %v1103 = vxor.u32 %v1102, 2147483648
    %v1104 = vmul.f32 %v1103, 1.442695
    %v1105 = vpow.pop %v1104
    %v1106 = vadd.f32 %v1105, 1.0
    %v1107 = vrcp.pop %v1106
    %v1108 = vmul.f32 %v1106, %v1107
    %v1109 = vsub.f32 1.0, %v1108
    %v1110 = vmul.f32 %v1107, %v1109
    %v1111 = vadd.f32 %v1107, %v1110
    %vm1112 = vweird.f32 %v1106
    %vm1113 = vweird.f32 %v1107
    %vm1114 = vmor %vm1112, %vm1113
    %v1115 = vsel %vm1114, %v1107, %v1111
    %v1116 = vand.u32 2147483647, %v1106
    %vm1117 = vcmp.eq.f32.partialorder %v1116, 8.507059e+37
    %v1118 = vand.u32 %v1106, 2147483648
    %v1119 = vor.u32 1.1754944e-38, %v1118
    %v1120 = vsel %vm1117, %v1119, %v1115
    %v1121 = vmul.f32 1.0, %v1120
    %v1122 = vtanh.pop %v1102
    %v1123 = vmul.f32 %v1121, %v1004
    %1125 = vrot.lane.b32.xlu0 %v1122, 64
    %v1126 = vpop.permute.xlu0 %1125
    %v1128 = vmul.f32 %v1121, %v1126
    %1130 = vrot.lane.b32.xlu0 %v1128, 32
    %v1131 = vpop.permute.xlu0 %1130
    %v1133 = vadd.f32 %v1123, %v1131
    %v1134 = vtanh.pop %v1133
    %1136 = vrot.lane.b32.xlu0 %v1134, 64
    %v1137 = vpop.permute.xlu0 %1136
    %v1139 = vmul.f32 %v1121, %v1137
    %1141 = vrot.lane.b32.xlu0 %v1139, 32
    %v1142 = vpop.permute.xlu0 %1141
    %1145 = vrot.lane.b32.xlu0 %v1079, 64
    %v1146 = vpop.permute.xlu0 %1145
    %v1148 = vsel %vm167, %v1142, %v1146
    %v1150 = vsel %vm97, %v1148, 0
    %1152 = vmatpush.msra.mxu0 0.0
    %1153 = vmatpush.msra.mxu0 0.0
    %1154 = vmatpush.msra.mxu0 0.0
    %1155 = vmatpush.msra.mxu0 0.0
    %1156 = vmatpush.msra.mxu0 0.0
    %1157 = vmatpush.msra.mxu0 0.0
    %1158 = vmatpush.msra.mxu0 0.0
    %1159 = vmatpush.msra.mxu0 0.0
    %1160 = vmatpush.msra.mxu0 %v241
    %1161 = vmatpush.msra.mxu0 %v240
    %1162 = vmatpush.msra.mxu0 %v239
    %1163 = vmatpush.msra.mxu0 %v238
    %1164 = vmatpush.msra.mxu0 %v237
    %1165 = vmatpush.msra.mxu0 %v236
    %1166 = vmatpush.msra.mxu0 %v235
    %1167 = vmatpush.msra.mxu0 %v234
    %1168 = vmatmul.f32.gmra.mxu0 %v1150
    %v1169 = vpop.f32.mrf.mxu0
    %v1170 = vadd.f32 %v244, %v1169
    %1171 = vdwg.mxu0
    %v1172 = vxor.u32 %v1170, 2147483648
    %v1173 = vmul.f32 %v1172, 1.442695
    %v1174 = vpow.pop %v1173
    %v1175 = vadd.f32 %v1174, 1.0
    %v1176 = vrcp.pop %v1175
    %v1177 = vmul.f32 %v1175, %v1176
    %v1178 = vsub.f32 1.0, %v1177
    %v1179 = vmul.f32 %v1176, %v1178
    %v1180 = vadd.f32 %v1176, %v1179
    %vm1181 = vweird.f32 %v1175
    %vm1182 = vweird.f32 %v1176
    %vm1183 = vmor %vm1181, %vm1182
    %v1184 = vsel %vm1183, %v1176, %v1180
    %v1185 = vand.u32 2147483647, %v1175
    %vm1186 = vcmp.eq.f32.partialorder %v1185, 8.507059e+37
    %v1187 = vand.u32 %v1175, 2147483648
    %v1188 = vor.u32 1.1754944e-38, %v1187
    %v1189 = vsel %vm1186, %v1188, %v1184
    %v1190 = vmul.f32 1.0, %v1189
    %v1191 = vtanh.pop %v1170
    %v1192 = vmul.f32 %v1190, %v1073
    %1194 = vrot.lane.b32.xlu0 %v1191, 64
    %v1195 = vpop.permute.xlu0 %1194
    %v1197 = vmul.f32 %v1190, %v1195
    %1199 = vrot.lane.b32.xlu0 %v1197, 32
    %v1200 = vpop.permute.xlu0 %1199
    %v1202 = vadd.f32 %v1192, %v1200
    %v1203 = vtanh.pop %v1202
    %1205 = vrot.lane.b32.xlu0 %v1203, 64
    %v1206 = vpop.permute.xlu0 %1205
    %v1208 = vmul.f32 %v1190, %v1206
    %v1209 = vld [vmem:[%s6] sm:$0xff]
    %v1210 = vld [vmem:[%s6 + $0x8] sm:$0xff]
    %v1211 = vld [vmem:[%s6 + $0x10] sm:$0xff]
    %v1212 = vld [vmem:[%s6 + $0x18] sm:$0xff]
    %v1213 = vld [vmem:[%s7] sm:$0x1]
    %v1215 = vperm.slane %v1213, 0
    %1218 = vrot.lane.b32.xlu0 %v1208, 32
    %v1219 = vpop.permute.xlu0 %1218
    %v1220 = vsel %vm167, %v1219, 0
    %1222 = vmatpush.msra.mxu0 0.0
    %1223 = vmatpush.msra.mxu0 0.0
    %1224 = vmatpush.msra.mxu0 0.0
    %1225 = vmatpush.msra.mxu0 0.0
    %1226 = vmatpush.msra.mxu0 0.0
    %1227 = vmatpush.msra.mxu0 0.0
    %1228 = vmatpush.msra.mxu0 0.0
    %1229 = vmatpush.msra.mxu0 0.0
    %1230 = vmatpush.msra.mxu0 0.0
    %1231 = vmatpush.msra.mxu0 0.0
    %1232 = vmatpush.msra.mxu0 0.0
    %1233 = vmatpush.msra.mxu0 0.0
    %1234 = vmatpush.msra.mxu0 %v1212
    %1235 = vmatpush.msra.mxu0 %v1211
    %1236 = vmatpush.msra.mxu0 %v1210
    %1237 = vmatpush.msra.mxu0 %v1209
    %1238 = vmatmul.f32.gmra.mxu0 %v1220
    %v1239 = vpop.f32.mrf.mxu0
    %v1240 = vadd.f32 %v1215, %v1239
    %1241 = vdwg.mxu0
    %vm1242 = vcmask 39936
    %1243 = vst.msk [vmem:[#allocation8] sm:$0xff] %vm1242, %v1240
    // Predicated region
    $region46: #{tpu_custom_call.1} parent=1 // pred_check
      _
    $region47: #{tpu_custom_call.1} parent=1 // pred_check_branch
      %1245 = sbr.rel (0) target = $region49
    $region48: #{tpu_custom_call.1} parent=1 // pred_region
      %1247 = vsyncadd [#allocation4], 0
      %s1249 = sshll.u32 [#allocation8], 4
      %s1250 = int_to_ptr.vmem [resolvable:$true] %s1249
      %s1251 = sshll.u32 %s8, 4
      %s1252 = int_to_ptr.hbm [resolvable:$true] %s1251
      %1254 = dma.vmem_to_hbm [thread:$0]  %s1250, 128, %s1252, [#allocation4]
    $region49: #{tpu_custom_call.1} parent=1 // pred_fallthru
      _
    // Predicated region
    $region50: #{tpu_custom_call.1} parent=1 // pred_check
      _
    $region51: #{tpu_custom_call.1} parent=1 // pred_check_branch
      %1256 = sbr.rel (0) target = $region53
    $region52: #{tpu_custom_call.1} parent=1 // pred_region
      %1258 = dma.done [#allocation4], 128
    $region53: #{tpu_custom_call.1} parent=1 // pred_fallthru
      _
    %1259 = vsyncpa [#allocation3], 1
    %1260 = vsyncpa [#allocation6], 1
    %1261 = vsyncpa [#allocation4], 1

</llo_original>
